<compile_context>
chip_gen: v7x
topology: tpu7x:2x2x1
jax: 0.10.0
libtpu: 0.0.40
codegen_flags: <defaults>
</compile_context>

<pallas_src>
import jax
import jax.numpy as jnp
from jax.experimental import pallas as pl
from jax.experimental.pallas import tpu as pltpu


# ----------------------------------------------------------------------------
# Graph utilities (plain JAX; constructed once at model build time)
# ----------------------------------------------------------------------------
def ring_edge_index(n):
    src = jnp.arange(n)
    dst = (src + 1) % n
    return jnp.stack(
        [jnp.concatenate([src, dst]), jnp.concatenate([dst, src])], axis=0
    )


def normalized_adjacency(edge_index, n):
    a = jnp.zeros((n, n), jnp.float32)
    a = a.at[edge_index[0], edge_index[1]].set(1.0)
    a = a + jnp.eye(n, dtype=jnp.float32)                 # self loops
    d_inv_sqrt = 1.0 / jnp.sqrt(a.sum(axis=1))
    return a * d_inv_sqrt[:, None] * d_inv_sqrt[None, :]  # D^-1/2 (A+I) D^-1/2


def make_up_transform(n_fine, n_coarse):
    """Dense (n_fine, n_coarse) upsampling matrix: each fine vertex averages
    two neighboring coarse vertices (deterministic, rows sum to 1)."""
    rows = jnp.arange(n_fine)
    c0 = rows // (n_fine // n_coarse)
    c1 = (c0 + 1) % n_coarse
    u = jnp.zeros((n_fine, n_coarse), jnp.float32)
    u = u.at[rows, c0].add(0.5)
    u = u.at[rows, c1].add(0.5)
    return u


# ----------------------------------------------------------------------------
# Fused decoder kernel: whole forward for one batch element per grid step.
# All operands are full-array VMEM blocks; all math is 2-D MXU matmuls + a
# couple of VPU adds/relus.  No in-kernel reshape/transpose.
# ----------------------------------------------------------------------------
def _decoder_kernel(lat_ref, eyetile_ref, vmask_ref, fws_ref, fcb_ref,
                    u0_ref, a32_ref, w0_ref, b0_ref,
                    u1_ref, a64_ref, w1_ref, b1_ref,
                    wout_ref, bout_ref, out_ref):
    f32 = jnp.float32

    def mm(a, b):
        return jnp.dot(a, b, preferred_element_type=f32)

    b = pl.program_id(0)
    lat = lat_ref[pl.ds(b, 1), :]                       # (1, L) this batch row

    # ---- fc:  x0[v, c] = sum_l lat[l] * fc_w[l, v*C0 + c] + fc_b[v*C0 + c]
    # Implemented without any reshape:
    #   lat_rep  = lat @ eye_tile           -> lat tiled per coarse vertex
    #   lat_kron = vmask * lat_rep          -> kron(I_V0, lat)
    #   x0       = lat_kron @ fws + fcb     -> (V0, C0) directly
    lat_rep = mm(lat, eyetile_ref[...])                 # (1, V0*L)
    lat_kron = vmask_ref[...] * lat_rep                 # (V0, V0*L)
    x = mm(lat_kron, fws_ref[...]) + fcb_ref[...]       # (V0, C0)

    # ---- level 0 -> 1: upsample + GCN ( A @ (x @ W) + b ) + relu
    x = mm(u0_ref[...], x)                                                   # (V1, C0)
    x = jnp.maximum(mm(a32_ref[...], mm(x, w0_ref[...])) + b0_ref[...], 0.0)  # (V1, C1)

    # ---- level 1 -> 2: upsample + GCN + relu
    x = mm(u1_ref[...], x)                                                   # (V2, C1)
    x = jnp.maximum(mm(a64_ref[...], mm(x, w1_ref[...])) + b1_ref[...], 0.0)  # (V2, C2)

    # ---- output GCN (no activation)
    x = mm(a64_ref[...], mm(x, wout_ref[...])) + bout_ref[...]               # (V2, 3)

    out_ref[...] = x.astype(out_ref.dtype)


# ----------------------------------------------------------------------------
# MeshNet
# ----------------------------------------------------------------------------
class MeshNetPallas:
    # level vertex counts, coarse -> fine
    VERTS = (16, 32, 64)
    # decoder channel schedule
    C0 = 32              # channels right after the fc/reshape (at 16 verts)
    CHANNELS = (32, 16)  # channels after each upsample+conv (at 32, 64 verts)
    OUT_CH = 3
    LATENT_DIM = 32

    def __init__(self, key):
        ks = jax.random.split(key, 8)
        v0, v1, v2 = self.VERTS
        L, c0 = self.LATENT_DIM, self.C0
        c1, c2 = self.CHANNELS

        fc_w = 0.05 * jax.random.normal(ks[0], (L, v0 * c0))
        fc_b = 0.01 * jax.random.normal(ks[1], (v0 * c0,))
        conv0_w = 0.05 * jax.random.normal(ks[2], (c0, c1))
        conv0_b = 0.01 * jax.random.normal(ks[3], (c1,))
        conv1_w = 0.05 * jax.random.normal(ks[4], (c1, c2))
        conv1_b = 0.01 * jax.random.normal(ks[5], (c2,))
        conv_out_w = 0.05 * jax.random.normal(ks[6], (c2, self.OUT_CH))
        conv_out_b = 0.01 * jax.random.normal(ks[7], (self.OUT_CH,))

        # keep originals for the pure-JAX reference check
        self._fc_w, self._fc_b = fc_w, fc_b

        # graph structure per level (edge_index -> normalized dense adjacency)
        self.a32 = normalized_adjacency(ring_edge_index(v1), v1)   # (32, 32)
        self.a64 = normalized_adjacency(ring_edge_index(v2), v2)   # (64, 64)
        # up_transform[i] maps level i -> level i+1 (coarse -> fine)
        self.u0 = make_up_transform(v1, v0)                        # (32, 16)
        self.u1 = make_up_transform(v2, v1)                        # (64, 32)

        # ---- one-time rearrangements so the fused kernel needs NO per-forward
        #      glue (no jnp.tile / reshape / transpose in the hot path) ----
        # fws[v*L + l, c]       = fc_w[l, v*C0 + c]   (vertical block stack)
        self.fws = fc_w.reshape(L, v0, c0).transpose(1, 0, 2).reshape(v0 * L, c0)
        # fcb[v, c]             = fc_b[v*C0 + c]
        self.fcb = fc_b.reshape(v0, c0)
        # eye_tile[l', v*L + l] = (l' == l)   -> lat @ eye_tile tiles lat per vertex
        self.eye_tile = jnp.tile(jnp.eye(L, dtype=jnp.float32), (1, v0))
        # vmask[v, v'*L + l]    = (v == v')   -> selects the v-th lat copy
        self.vmask = jnp.repeat(jnp.eye(v0, dtype=jnp.float32), L, axis=1)

        # biases stored as 2-D rows (broadcast over vertices inside the kernel)
        self.w0, self.b0 = conv0_w, conv0_b.reshape(1, c1)
        self.w1, self.b1 = conv1_w, conv1_b.reshape(1, c2)
        self.wout, self.bout = conv_out_w, conv_out_b.reshape(1, self.OUT_CH)

    # -------------------- fused Pallas forward --------------------
    def decode(self, lat_vecs):
        B = lat_vecs.shape[0]
        L = self.LATENT_DIM
        v2 = self.VERTS[2]

        consts = [self.eye_tile, self.vmask, self.fws, self.fcb,
                  self.u0, self.a32, self.w0, self.b0,
                  self.u1, self.a64, self.w1, self.b1,
                  self.wout, self.bout]

        def full_spec(arr):
            zeros = (0,) * arr.ndim
            return pl.BlockSpec(arr.shape, lambda b, zeros=zeros: zeros)

        in_specs = [pl.BlockSpec((B, L), lambda b: (0, 0))] + [
            full_spec(c) for c in consts
        ]

        return pl.pallas_call(
            _decoder_kernel,
            grid=(B,),
            in_specs=in_specs,
            out_specs=pl.BlockSpec((None, v2, self.OUT_CH), lambda b: (b, 0, 0)),
            out_shape=jax.ShapeDtypeStruct((B, v2, self.OUT_CH), jnp.float32),
            compiler_params=pltpu.CompilerParams(
                dimension_semantics=("parallel",)),
        )(lat_vecs.astype(jnp.float32), *consts)

    # -------------------- pure-JAX reference (correctness guard) --------------------
    def reference_decode(self, lat_vecs):
        B = lat_vecs.shape[0]
        x = lat_vecs @ self._fc_w + self._fc_b                       # (B, V0*C0)
        x = x.reshape(B, self.VERTS[0], self.C0)                     # (B, 16, 32)
        x = jnp.einsum("uv,bvc->buc", self.u0, x)                    # (B, 32, 32)
        x = jnp.maximum(jnp.einsum("uv,bvc->buc", self.a32, x @ self.w0) + self.b0, 0.0)
        x = jnp.einsum("uv,bvc->buc", self.u1, x)                    # (B, 64, 32)
        x = jnp.maximum(jnp.einsum("uv,bvc->buc", self.a64, x @ self.w1) + self.b1, 0.0)
        x = jnp.einsum("uv,bvc->buc", self.a64, x @ self.wout) + self.bout
        return x                                                     # (B, 64, 3)

    def __call__(self, lat_vecs, data=None):
        end_points = {}
        end_points["mesh_out_pred"] = self.decode(lat_vecs)
        return end_points


if __name__ == "__main__":
    key = jax.random.PRNGKey(0)
    k_param, k_in = jax.random.split(key)

    model = MeshNetPallas(k_param)

    B = 2
    lat_vecs = jax.random.normal(k_in, (B, MeshNetPallas.LATENT_DIM), jnp.float32)

    fwd = jax.jit(lambda z: model(z))
    end_points = fwd(lat_vecs)
    mesh_out = jax.block_until_ready(end_points["mesh_out_pred"])

    assert mesh_out.shape == (B, 64, 3), mesh_out.shape
    assert mesh_out.dtype == jnp.float32
    assert bool(jnp.all(jnp.isfinite(mesh_out)))

    # verify the fused kernel against the straightforward JAX decoder
    ref = jax.block_until_ready(model.reference_decode(lat_vecs))
    assert bool(jnp.allclose(mesh_out, ref, atol=1e-4, rtol=1e-4)), (
        float(jnp.max(jnp.abs(mesh_out - ref))))

    print("KERNEL_OK")
</pallas_src>

<mosaic_0001>
module attributes {stable_mosaic.version = 11 : i64} {
  func.func @_decoder_kernel(%arg0: i32, %arg1: memref<2x32xf32, #tpu.memory_space<vmem>>, %arg2: memref<32x512xf32, #tpu.memory_space<vmem>>, %arg3: memref<16x512xf32, #tpu.memory_space<vmem>>, %arg4: memref<512x32xf32, #tpu.memory_space<vmem>>, %arg5: memref<16x32xf32, #tpu.memory_space<vmem>>, %arg6: memref<32x16xf32, #tpu.memory_space<vmem>>, %arg7: memref<32x32xf32, #tpu.memory_space<vmem>>, %arg8: memref<32x32xf32, #tpu.memory_space<vmem>>, %arg9: memref<1x32xf32, #tpu.memory_space<vmem>>, %arg10: memref<64x32xf32, #tpu.memory_space<vmem>>, %arg11: memref<64x64xf32, #tpu.memory_space<vmem>>, %arg12: memref<32x16xf32, #tpu.memory_space<vmem>>, %arg13: memref<1x16xf32, #tpu.memory_space<vmem>>, %arg14: memref<16x3xf32, #tpu.memory_space<vmem>>, %arg15: memref<1x3xf32, #tpu.memory_space<vmem>>, %arg16: memref<1x64x3xf32, #tpu.memory_space<vmem>>) attributes {dimension_semantics = [#tpu.dimension_semantics<parallel>], iteration_bounds = array<i64: 2>, scalar_prefetch = 0 : i64, scratch_operands = 0 : i64, tpu.core_type = #tpu.core_type<tc>, window_params = [{pipeline_mode = #tpu.pipeline_mode<synchronous>, transform_indices = @transform_0, window_bounds = array<i64: 2, 32>}, {pipeline_mode = #tpu.pipeline_mode<synchronous>, transform_indices = @transform_1, window_bounds = array<i64: 32, 512>}, {pipeline_mode = #tpu.pipeline_mode<synchronous>, transform_indices = @transform_2, window_bounds = array<i64: 16, 512>}, {pipeline_mode = #tpu.pipeline_mode<synchronous>, transform_indices = @transform_3, window_bounds = array<i64: 512, 32>}, {pipeline_mode = #tpu.pipeline_mode<synchronous>, transform_indices = @transform_4, window_bounds = array<i64: 16, 32>}, {pipeline_mode = #tpu.pipeline_mode<synchronous>, transform_indices = @transform_5, window_bounds = array<i64: 32, 16>}, {pipeline_mode = #tpu.pipeline_mode<synchronous>, transform_indices = @transform_6, window_bounds = array<i64: 32, 32>}, {pipeline_mode = #tpu.pipeline_mode<synchronous>, transform_indices = @transform_7, window_bounds = array<i64: 32, 32>}, {pipeline_mode = #tpu.pipeline_mode<synchronous>, transform_indices = @transform_8, window_bounds = array<i64: 1, 32>}, {pipeline_mode = #tpu.pipeline_mode<synchronous>, transform_indices = @transform_9, window_bounds = array<i64: 64, 32>}, {pipeline_mode = #tpu.pipeline_mode<synchronous>, transform_indices = @transform_10, window_bounds = array<i64: 64, 64>}, {pipeline_mode = #tpu.pipeline_mode<synchronous>, transform_indices = @transform_11, window_bounds = array<i64: 32, 16>}, {pipeline_mode = #tpu.pipeline_mode<synchronous>, transform_indices = @transform_12, window_bounds = array<i64: 1, 16>}, {pipeline_mode = #tpu.pipeline_mode<synchronous>, transform_indices = @transform_13, window_bounds = array<i64: 16, 3>}, {pipeline_mode = #tpu.pipeline_mode<synchronous>, transform_indices = @transform_14, window_bounds = array<i64: 1, 3>}, {transform_indices = @transform_15, window_bounds = array<i64: 1, 64, 3>}]} {
    %0 = arith.index_cast %arg0 : i32 to index
    %c0 = arith.constant 0 : index
    %1 = vector.load %arg1[%0, %c0] : memref<2x32xf32, #tpu.memory_space<vmem>>, vector<1x32xf32>
    %c0_0 = arith.constant 0 : index
    %c0_1 = arith.constant 0 : index
    %2 = vector.load %arg2[%c0_0, %c0_1] : memref<32x512xf32, #tpu.memory_space<vmem>>, vector<32x512xf32>
    %cst = arith.constant dense<0.000000e+00> : vector<1x512xf32>
    %3 = tpu.matmul %1, %2, %cst {dimension_numbers = #tpu.dot_dimension_numbers<[1], [0], [0], [1], [0, 0, 1, 1], [], []>} : vector<1x32xf32>, vector<32x512xf32>, vector<1x512xf32> -> vector<1x512xf32>
    %c0_2 = arith.constant 0 : index
    %c0_3 = arith.constant 0 : index
    %4 = vector.load %arg3[%c0_2, %c0_3] : memref<16x512xf32, #tpu.memory_space<vmem>>, vector<16x512xf32>
    %5 = vector.broadcast %3 : vector<1x512xf32> to vector<16x512xf32>
    %6 = arith.mulf %4, %5 : vector<16x512xf32>
    %c0_4 = arith.constant 0 : index
    %c0_5 = arith.constant 0 : index
    %7 = vector.load %arg4[%c0_4, %c0_5] : memref<512x32xf32, #tpu.memory_space<vmem>>, vector<512x32xf32>
    %cst_6 = arith.constant dense<0.000000e+00> : vector<16x32xf32>
    %8 = tpu.matmul %6, %7, %cst_6 {dimension_numbers = #tpu.dot_dimension_numbers<[1], [0], [0], [1], [0, 0, 1, 1], [], []>} : vector<16x512xf32>, vector<512x32xf32>, vector<16x32xf32> -> vector<16x32xf32>
    %c0_7 = arith.constant 0 : index
    %c0_8 = arith.constant 0 : index
    %9 = vector.load %arg5[%c0_7, %c0_8] : memref<16x32xf32, #tpu.memory_space<vmem>>, vector<16x32xf32>
    %10 = arith.addf %8, %9 : vector<16x32xf32>
    %c0_9 = arith.constant 0 : index
    %c0_10 = arith.constant 0 : index
    %11 = vector.load %arg6[%c0_9, %c0_10] : memref<32x16xf32, #tpu.memory_space<vmem>>, vector<32x16xf32>
    %cst_11 = arith.constant dense<0.000000e+00> : vector<32x32xf32>
    %12 = tpu.matmul %11, %10, %cst_11 {dimension_numbers = #tpu.dot_dimension_numbers<[1], [0], [0], [1], [0, 0, 1, 1], [], []>} : vector<32x16xf32>, vector<16x32xf32>, vector<32x32xf32> -> vector<32x32xf32>
    %c0_12 = arith.constant 0 : index
    %c0_13 = arith.constant 0 : index
    %13 = vector.load %arg7[%c0_12, %c0_13] : memref<32x32xf32, #tpu.memory_space<vmem>>, vector<32x32xf32>
    %c0_14 = arith.constant 0 : index
    %c0_15 = arith.constant 0 : index
    %14 = vector.load %arg8[%c0_14, %c0_15] : memref<32x32xf32, #tpu.memory_space<vmem>>, vector<32x32xf32>
    %cst_16 = arith.constant dense<0.000000e+00> : vector<32x32xf32>
    %15 = tpu.matmul %12, %14, %cst_16 {dimension_numbers = #tpu.dot_dimension_numbers<[1], [0], [0], [1], [0, 0, 1, 1], [], []>} : vector<32x32xf32>, vector<32x32xf32>, vector<32x32xf32> -> vector<32x32xf32>
    %cst_17 = arith.constant dense<0.000000e+00> : vector<32x32xf32>
    %16 = tpu.matmul %13, %15, %cst_17 {dimension_numbers = #tpu.dot_dimension_numbers<[1], [0], [0], [1], [0, 0, 1, 1], [], []>} : vector<32x32xf32>, vector<32x32xf32>, vector<32x32xf32> -> vector<32x32xf32>
    %c0_18 = arith.constant 0 : index
    %c0_19 = arith.constant 0 : index
    %17 = vector.load %arg9[%c0_18, %c0_19] : memref<1x32xf32, #tpu.memory_space<vmem>>, vector<1x32xf32>
    %18 = vector.broadcast %17 : vector<1x32xf32> to vector<32x32xf32>
    %19 = arith.addf %16, %18 : vector<32x32xf32>
    %cst_20 = arith.constant 0.000000e+00 : f32
    %20 = vector.broadcast %cst_20 : f32 to vector<32x32xf32>
    %21 = arith.maximumf %19, %20 : vector<32x32xf32>
    %c0_21 = arith.constant 0 : index
    %c0_22 = arith.constant 0 : index
    %22 = vector.load %arg10[%c0_21, %c0_22] : memref<64x32xf32, #tpu.memory_space<vmem>>, vector<64x32xf32>
    %cst_23 = arith.constant dense<0.000000e+00> : vector<64x32xf32>
    %23 = tpu.matmul %22, %21, %cst_23 {dimension_numbers = #tpu.dot_dimension_numbers<[1], [0], [0], [1], [0, 0, 1, 1], [], []>} : vector<64x32xf32>, vector<32x32xf32>, vector<64x32xf32> -> vector<64x32xf32>
    %c0_24 = arith.constant 0 : index
    %c0_25 = arith.constant 0 : index
    %24 = vector.load %arg11[%c0_24, %c0_25] : memref<64x64xf32, #tpu.memory_space<vmem>>, vector<64x64xf32>
    %c0_26 = arith.constant 0 : index
    %c0_27 = arith.constant 0 : index
    %25 = vector.load %arg12[%c0_26, %c0_27] : memref<32x16xf32, #tpu.memory_space<vmem>>, vector<32x16xf32>
    %cst_28 = arith.constant dense<0.000000e+00> : vector<64x16xf32>
    %26 = tpu.matmul %23, %25, %cst_28 {dimension_numbers = #tpu.dot_dimension_numbers<[1], [0], [0], [1], [0, 0, 1, 1], [], []>} : vector<64x32xf32>, vector<32x16xf32>, vector<64x16xf32> -> vector<64x16xf32>
    %cst_29 = arith.constant dense<0.000000e+00> : vector<64x16xf32>
    %27 = tpu.matmul %24, %26, %cst_29 {dimension_numbers = #tpu.dot_dimension_numbers<[1], [0], [0], [1], [0, 0, 1, 1], [], []>} : vector<64x64xf32>, vector<64x16xf32>, vector<64x16xf32> -> vector<64x16xf32>
    %c0_30 = arith.constant 0 : index
    %c0_31 = arith.constant 0 : index
    %28 = vector.load %arg13[%c0_30, %c0_31] : memref<1x16xf32, #tpu.memory_space<vmem>>, vector<1x16xf32>
    %29 = vector.broadcast %28 : vector<1x16xf32> to vector<64x16xf32>
    %30 = arith.addf %27, %29 : vector<64x16xf32>
    %cst_32 = arith.constant 0.000000e+00 : f32
    %31 = vector.broadcast %cst_32 : f32 to vector<64x16xf32>
    %32 = arith.maximumf %30, %31 : vector<64x16xf32>
    %c0_33 = arith.constant 0 : index
    %c0_34 = arith.constant 0 : index
    %33 = vector.load %arg11[%c0_33, %c0_34] : memref<64x64xf32, #tpu.memory_space<vmem>>, vector<64x64xf32>
    %c0_35 = arith.constant 0 : index
    %c0_36 = arith.constant 0 : index
    %34 = vector.load %arg14[%c0_35, %c0_36] : memref<16x3xf32, #tpu.memory_space<vmem>>, vector<16x3xf32>
    %cst_37 = arith.constant dense<0.000000e+00> : vector<64x3xf32>
    %35 = tpu.matmul %32, %34, %cst_37 {dimension_numbers = #tpu.dot_dimension_numbers<[1], [0], [0], [1], [0, 0, 1, 1], [], []>} : vector<64x16xf32>, vector<16x3xf32>, vector<64x3xf32> -> vector<64x3xf32>
    %cst_38 = arith.constant dense<0.000000e+00> : vector<64x3xf32>
    %36 = tpu.matmul %33, %35, %cst_38 {dimension_numbers = #tpu.dot_dimension_numbers<[1], [0], [0], [1], [0, 0, 1, 1], [], []>} : vector<64x64xf32>, vector<64x3xf32>, vector<64x3xf32> -> vector<64x3xf32>
    %c0_39 = arith.constant 0 : index
    %c0_40 = arith.constant 0 : index
    %37 = vector.load %arg15[%c0_39, %c0_40] : memref<1x3xf32, #tpu.memory_space<vmem>>, vector<1x3xf32>
    %38 = vector.broadcast %37 : vector<1x3xf32> to vector<64x3xf32>
    %39 = arith.addf %36, %38 : vector<64x3xf32>
    %c0_41 = arith.constant 0 : index
    %c0_42 = arith.constant 0 : index
    %c0_43 = arith.constant 0 : index
    %40 = vector.load %arg16[%c0_41, %c0_42, %c0_43] : memref<1x64x3xf32, #tpu.memory_space<vmem>>, vector<1x64x3xf32>
    %41 = vector.shape_cast %40 : vector<1x64x3xf32> to vector<64x3xf32>
    %42 = vector.shape_cast %39 : vector<64x3xf32> to vector<1x64x3xf32>
    tpu.vector_store %arg16[%c0_41, %c0_42, %c0_43], %42 {strides = array<i32>} : memref<1x64x3xf32, #tpu.memory_space<vmem>>, vector<1x64x3xf32>,
    return
  }
  func.func @transform_0(%arg0: i32) -> (i32, i32) {
    %c0_i32 = arith.constant 0 : i32
    %c0_i32_0 = arith.constant 0 : i32
    %c0_i32_1 = arith.constant 0 : i32
    return %c0_i32, %c0_i32_0 : i32, i32
  }
  func.func @transform_1(%arg0: i32) -> (i32, i32) {
    %c0_i32 = arith.constant 0 : i32
    %c0_i32_0 = arith.constant 0 : i32
    %c0_i32_1 = arith.constant 0 : i32
    return %c0_i32, %c0_i32_0 : i32, i32
  }
  func.func @transform_2(%arg0: i32) -> (i32, i32) {
    %c0_i32 = arith.constant 0 : i32
    %c0_i32_0 = arith.constant 0 : i32
    %c0_i32_1 = arith.constant 0 : i32
    return %c0_i32, %c0_i32_0 : i32, i32
  }
  func.func @transform_3(%arg0: i32) -> (i32, i32) {
    %c0_i32 = arith.constant 0 : i32
    %c0_i32_0 = arith.constant 0 : i32
    %c0_i32_1 = arith.constant 0 : i32
    return %c0_i32, %c0_i32_0 : i32, i32
  }
  func.func @transform_4(%arg0: i32) -> (i32, i32) {
    %c0_i32 = arith.constant 0 : i32
    %c0_i32_0 = arith.constant 0 : i32
    %c0_i32_1 = arith.constant 0 : i32
    return %c0_i32, %c0_i32_0 : i32, i32
  }
  func.func @transform_5(%arg0: i32) -> (i32, i32) {
    %c0_i32 = arith.constant 0 : i32
    %c0_i32_0 = arith.constant 0 : i32
    %c0_i32_1 = arith.constant 0 : i32
    return %c0_i32, %c0_i32_0 : i32, i32
  }
  func.func @transform_6(%arg0: i32) -> (i32, i32) {
    %c0_i32 = arith.constant 0 : i32
    %c0_i32_0 = arith.constant 0 : i32
    %c0_i32_1 = arith.constant 0 : i32
    return %c0_i32, %c0_i32_0 : i32, i32
  }
  func.func @transform_7(%arg0: i32) -> (i32, i32) {
    %c0_i32 = arith.constant 0 : i32
    %c0_i32_0 = arith.constant 0 : i32
    %c0_i32_1 = arith.constant 0 : i32
    return %c0_i32, %c0_i32_0 : i32, i32
  }
  func.func @transform_8(%arg0: i32) -> (i32, i32) {
    %c0_i32 = arith.constant 0 : i32
    %c0_i32_0 = arith.constant 0 : i32
    %c0_i32_1 = arith.constant 0 : i32
    return %c0_i32, %c0_i32_0 : i32, i32
  }
  func.func @transform_9(%arg0: i32) -> (i32, i32) {
    %c0_i32 = arith.constant 0 : i32
    %c0_i32_0 = arith.constant 0 : i32
    %c0_i32_1 = arith.constant 0 : i32
    return %c0_i32, %c0_i32_0 : i32, i32
  }
  func.func @transform_10(%arg0: i32) -> (i32, i32) {
    %c0_i32 = arith.constant 0 : i32
    %c0_i32_0 = arith.constant 0 : i32
    %c0_i32_1 = arith.constant 0 : i32
    return %c0_i32, %c0_i32_0 : i32, i32
  }
  func.func @transform_11(%arg0: i32) -> (i32, i32) {
    %c0_i32 = arith.constant 0 : i32
    %c0_i32_0 = arith.constant 0 : i32
    %c0_i32_1 = arith.constant 0 : i32
    return %c0_i32, %c0_i32_0 : i32, i32
  }
  func.func @transform_12(%arg0: i32) -> (i32, i32) {
    %c0_i32 = arith.constant 0 : i32
    %c0_i32_0 = arith.constant 0 : i32
    %c0_i32_1 = arith.constant 0 : i32
    return %c0_i32, %c0_i32_0 : i32, i32
  }
  func.func @transform_13(%arg0: i32) -> (i32, i32) {
    %c0_i32 = arith.constant 0 : i32
    %c0_i32_0 = arith.constant 0 : i32
    %c0_i32_1 = arith.constant 0 : i32
    return %c0_i32, %c0_i32_0 : i32, i32
  }
  func.func @transform_14(%arg0: i32) -> (i32, i32) {
    %c0_i32 = arith.constant 0 : i32
    %c0_i32_0 = arith.constant 0 : i32
    %c0_i32_1 = arith.constant 0 : i32
    return %c0_i32, %c0_i32_0 : i32, i32
  }
  func.func @transform_15(%arg0: i32) -> (i32, i32, i32) {
    %c0_i32 = arith.constant 0 : i32
    %c0_i32_0 = arith.constant 0 : i32
    %c0_i32_1 = arith.constant 0 : i32
    return %arg0, %c0_i32, %c0_i32_0 : i32, i32, i32
  }
}

</mosaic_0001>

<llo_original>
// kernel: _lambda_.1
$region0: #{_lambda_.1}
  #allocation0 [shape = 'u32[]', space=smem, size = 0x4, offset = 0x4, fixed_abs, tag = 'smem constant byte address 0x4 - core index']
  #allocation1 [shape = 'u32[144,128]{1,0:T(1,128)}', space=vmem, size = 0x12000, scoped, tag = 'internal scratch']
  %s0 = inlined_call_operand.hbm [shape: f32[2,32], index: 0, kind: input, shape index: {}]
  %s1 = inlined_call_operand.hbm [shape: f32[32,512], index: 1, kind: input, shape index: {}]
  %s2 = inlined_call_operand.hbm [shape: f32[16,512], index: 2, kind: input, shape index: {}]
  %s3 = inlined_call_operand.hbm [shape: f32[512,32], index: 3, kind: input, shape index: {}]
  %s4 = inlined_call_operand.hbm [shape: f32[16,32], index: 4, kind: input, shape index: {}]
  %s5 = inlined_call_operand.hbm [shape: f32[32,16], index: 5, kind: input, shape index: {}]
  %s6 = inlined_call_operand.hbm [shape: f32[32,32], index: 6, kind: input, shape index: {}]
  %s7 = inlined_call_operand.hbm [shape: f32[32,32], index: 7, kind: input, shape index: {}]
  %s8 = inlined_call_operand.hbm [shape: f32[1,32], index: 8, kind: input, shape index: {}]
  %s9 = inlined_call_operand.hbm [shape: f32[64,32], index: 9, kind: input, shape index: {}]
  %s10 = inlined_call_operand.hbm [shape: f32[64,64], index: 10, kind: input, shape index: {}]
  %s11 = inlined_call_operand.vmem [shape: f32[32,16], index: 11, kind: input, shape index: {}]
  %s12 = inlined_call_operand.hbm [shape: f32[1,16], index: 12, kind: input, shape index: {}]
  %s13 = inlined_call_operand.vmem [shape: f32[16,3], index: 13, kind: input, shape index: {}]
  %s14 = inlined_call_operand.vmem [shape: f32[1,3], index: 14, kind: input, shape index: {}]
  %s15 = inlined_call_operand.vmem [shape: f32[2,64,3], index: 15, kind: output, shape index: {}]
  %s16 = sld [smem:[#allocation0]]
  $region141: #{_lambda_.1} parent=0
    _
  %s18 = ssub.s32 1, %s16
  %s19 = scalar_select 0, %s18, %s16
  $region1: #{_lambda_.1} parent=0
    #allocation2 [shape = 'u8[1024]{0}', space=vmem, size = 0x400, scoped, tag = 'input window, operand 0, single buffered']
    #allocation3 [shape = 's32[2]{0}', space=sflag, size = 0x8, scoped, tag = 'scoped memory for _lambda_.1']
    #allocation4 [shape = 'u8[65536]{0}', space=vmem, size = 0x10000, scoped, tag = 'input window, operand 1, single buffered']
    #allocation5 [shape = 's32[1]{0}', space=sflag, size = 0x4, scoped, tag = 'scoped memory for _lambda_.1']
    #allocation6 [shape = 'u8[32768]{0}', space=vmem, size = 0x8000, scoped, tag = 'input window, operand 2, single buffered']
    #allocation7 [shape = 'u8[262144]{0}', space=vmem, size = 0x40000, scoped, tag = 'input window, operand 3, single buffered']
    #allocation8 [shape = 's32[1]{0}', space=sflag, size = 0x4, scoped, tag = 'scoped memory for _lambda_.1']
    #allocation9 [shape = 'u8[8192]{0}', space=vmem, size = 0x2000, scoped, tag = 'input window, operand 4, single buffered']
    #allocation10 [shape = 'u8[16384]{0}', space=vmem, size = 0x4000, scoped, tag = 'input window, operand 5, single buffered']
    #allocation11 [shape = 's32[1]{0}', space=sflag, size = 0x4, scoped, tag = 'scoped memory for _lambda_.1']
    #allocation12 [shape = 'u8[16384]{0}', space=vmem, size = 0x4000, scoped, tag = 'input window, operand 6, single buffered']
    #allocation13 [shape = 'u8[16384]{0}', space=vmem, size = 0x4000, scoped, tag = 'input window, operand 7, single buffered']
    #allocation14 [shape = 's32[1]{0}', space=sflag, size = 0x4, scoped, tag = 'scoped memory for _lambda_.1']
    #allocation15 [shape = 'u8[512]{0}', space=vmem, size = 0x400, scoped, tag = 'input window, operand 8, single buffered']
    #allocation16 [shape = 'u8[32768]{0}', space=vmem, size = 0x8000, scoped, tag = 'input window, operand 9, single buffered']
    #allocation17 [shape = 's32[1]{0}', space=sflag, size = 0x4, scoped, tag = 'scoped memory for _lambda_.1']
    #allocation18 [shape = 'u8[32768]{0}', space=vmem, size = 0x8000, scoped, tag = 'input window, operand 10, single buffered']
    #allocation19 [shape = 'u8[512]{0}', space=vmem, size = 0x400, scoped, tag = 'input window, operand 12, single buffered']
    #allocation20 [shape = 's32[1]{0}', space=sflag, size = 0x4, scoped, tag = 'scoped memory for _lambda_.1']
    %20 = vsyncpa [#allocation3], 0
    %21 = vsyncpa [#allocation5], 0
    %22 = vsyncpa [#allocation8], 0
    %23 = vsyncpa [#allocation11], 0
    %24 = vsyncpa [#allocation14], 0
    %25 = vsyncpa [#allocation17], 0
    %26 = vsyncpa [#allocation20], 0
    loop: start=0, step=1, limit=4
    $region2: #{_lambda_.1} parent=1 // loop_pre_header
      _
    $region3: #{_lambda_.1} parent=1 // loop_header
      %s28 = sphi 0, %s32
      %p29 = scmp.ge.s32.totalorder %s28, 4
      %s36 = sphi 0, %s36
      %s38 = sphi 0, %s36
      %s39 = sphi 0, %s38
      %s53 = sphi 0, %s39
      %s57 = sphi 0, %s57
      %s59 = sphi 0, %s57
      %s60 = sphi 0, %s59
      %s74 = sphi 0, %s60
      %s78 = sphi 0, %s78
      %s80 = sphi 0, %s78
      %s81 = sphi 0, %s80
      %s95 = sphi 0, %s81
      %s99 = sphi 0, %s99
      %s101 = sphi 0, %s99
      %s102 = sphi 0, %s101
      %s116 = sphi 0, %s102
      %s120 = sphi 0, %s120
      %s122 = sphi 0, %s120
      %s123 = sphi 0, %s122
      %s137 = sphi 0, %s123
      %s141 = sphi 0, %s141
      %s143 = sphi 0, %s141
      %s144 = sphi 0, %s143
      %s158 = sphi 0, %s144
      %s162 = sphi 0, %s162
      %s164 = sphi 0, %s162
      %s165 = sphi 0, %s164
      %s179 = sphi 0, %s165
      %s183 = sphi 0, %s183
      %s185 = sphi 0, %s183
      %s186 = sphi 0, %s185
      %s200 = sphi 0, %s186
      %s204 = sphi 0, %s204
      %s206 = sphi 0, %s204
      %s207 = sphi 0, %s206
      %s221 = sphi 0, %s207
      %s225 = sphi 0, %s225
      %s227 = sphi 0, %s225
      %s228 = sphi 0, %s227
      %s242 = sphi 0, %s228
      %s246 = sphi 0, %s246
      %s248 = sphi 0, %s246
      %s249 = sphi 0, %s248
      %s263 = sphi 0, %s249
      %s267 = sphi 0, %s267
      %s269 = sphi 0, %s267
      %s270 = sphi 0, %s269
      %s284 = sphi 0, %s270
      %s288 = sphi 0, %s288
      %s290 = sphi 0, %s288
      %s291 = sphi 0, %s290
      %s305 = sphi 0, %s291
      %s309 = sphi 0, %s309
      %s311 = sphi 0, %s309
      %s312 = sphi 0, %s311
      %s326 = sphi 0, %s312
      %s330 = sphi 0, %s330
      %s332 = sphi 0, %s330
      %s333 = sphi 0, %s332
      %s347 = sphi 0, %s333
      %s353 = sphi 0, %s355
      %s356 = sphi 0, %s353
      %s357 = sphi 0, %s356
      %s373 = sphi 0, %s357
    $region4: #{_lambda_.1} parent=1 // loop_header_branch
      %31 = sbr.rel (%p29) target = $region8
    $region5: #{_lambda_.1} parent=1 // loop_body
      %s33 = ssub.s32 %s28, 1
      %s34 = ssub.s32 %s28, 2
      %s35 = sadd.s32 %s28, 1
      %s37 = sadd.s32 %s36, 1
      %p40 = scmp.eq.s32.totalorder %s28, 1
      %p41 = scmp.ne.s32.totalorder %s36, %s38
      %p42 = scmp.eq.s32.totalorder %s28, 0
      %p43 = por %p41, %p42
      %p44 = scmp.ne.s32.totalorder %s36, %s38
      %p45 = scmp.eq.s32.totalorder %s33, 1
      %p46 = por %p44, %p45
      %p47 = scmp.ne.s32.totalorder %s38, %s39
      %p48 = scmp.eq.s32.totalorder %s33, 0
      %p49 = por %p47, %p48
      %p50 = scmp.ne.s32.totalorder %s38, %s39
      %p51 = scmp.eq.s32.totalorder %s34, 1
      %p52 = por %p50, %p51
      %p54 = scmp.ne.s32.totalorder %s39, %s53
      %p55 = scmp.eq.s32.totalorder %s34, 0
      %p56 = por %p54, %p55
      %s58 = sadd.s32 %s57, 1
      %p61 = scmp.eq.s32.totalorder %s28, 1
      %p62 = scmp.ne.s32.totalorder %s57, %s59
      %p63 = scmp.eq.s32.totalorder %s28, 0
      %p64 = por %p62, %p63
      %p65 = scmp.ne.s32.totalorder %s57, %s59
      %p66 = scmp.eq.s32.totalorder %s33, 1
      %p67 = por %p65, %p66
      %p68 = scmp.ne.s32.totalorder %s59, %s60
      %p69 = scmp.eq.s32.totalorder %s33, 0
      %p70 = por %p68, %p69
      %p71 = scmp.ne.s32.totalorder %s59, %s60
      %p72 = scmp.eq.s32.totalorder %s34, 1
      %p73 = por %p71, %p72
      %p75 = scmp.ne.s32.totalorder %s60, %s74
      %p76 = scmp.eq.s32.totalorder %s34, 0
      %p77 = por %p75, %p76
      %s79 = sadd.s32 %s78, 1
      %p82 = scmp.eq.s32.totalorder %s28, 1
      %p83 = scmp.ne.s32.totalorder %s78, %s80
      %p84 = scmp.eq.s32.totalorder %s28, 0
      %p85 = por %p83, %p84
      %p86 = scmp.ne.s32.totalorder %s78, %s80
      %p87 = scmp.eq.s32.totalorder %s33, 1
      %p88 = por %p86, %p87
      %p89 = scmp.ne.s32.totalorder %s80, %s81
      %p90 = scmp.eq.s32.totalorder %s33, 0
      %p91 = por %p89, %p90
      %p92 = scmp.ne.s32.totalorder %s80, %s81
      %p93 = scmp.eq.s32.totalorder %s34, 1
      %p94 = por %p92, %p93
      %p96 = scmp.ne.s32.totalorder %s81, %s95
      %p97 = scmp.eq.s32.totalorder %s34, 0
      %p98 = por %p96, %p97
      %s100 = sadd.s32 %s99, 1
      %p103 = scmp.eq.s32.totalorder %s28, 1
      %p104 = scmp.ne.s32.totalorder %s99, %s101
      %p105 = scmp.eq.s32.totalorder %s28, 0
      %p106 = por %p104, %p105
      %p107 = scmp.ne.s32.totalorder %s99, %s101
      %p108 = scmp.eq.s32.totalorder %s33, 1
      %p109 = por %p107, %p108
      %p110 = scmp.ne.s32.totalorder %s101, %s102
      %p111 = scmp.eq.s32.totalorder %s33, 0
      %p112 = por %p110, %p111
      %p113 = scmp.ne.s32.totalorder %s101, %s102
      %p114 = scmp.eq.s32.totalorder %s34, 1
      %p115 = por %p113, %p114
      %p117 = scmp.ne.s32.totalorder %s102, %s116
      %p118 = scmp.eq.s32.totalorder %s34, 0
      %p119 = por %p117, %p118
      %s121 = sadd.s32 %s120, 1
      %p124 = scmp.eq.s32.totalorder %s28, 1
      %p125 = scmp.ne.s32.totalorder %s120, %s122
      %p126 = scmp.eq.s32.totalorder %s28, 0
      %p127 = por %p125, %p126
      %p128 = scmp.ne.s32.totalorder %s120, %s122
      %p129 = scmp.eq.s32.totalorder %s33, 1
      %p130 = por %p128, %p129
      %p131 = scmp.ne.s32.totalorder %s122, %s123
      %p132 = scmp.eq.s32.totalorder %s33, 0
      %p133 = por %p131, %p132
      %p134 = scmp.ne.s32.totalorder %s122, %s123
      %p135 = scmp.eq.s32.totalorder %s34, 1
      %p136 = por %p134, %p135
      %p138 = scmp.ne.s32.totalorder %s123, %s137
      %p139 = scmp.eq.s32.totalorder %s34, 0
      %p140 = por %p138, %p139
      %s142 = sadd.s32 %s141, 1
      %p145 = scmp.eq.s32.totalorder %s28, 1
      %p146 = scmp.ne.s32.totalorder %s141, %s143
      %p147 = scmp.eq.s32.totalorder %s28, 0
      %p148 = por %p146, %p147
      %p149 = scmp.ne.s32.totalorder %s141, %s143
      %p150 = scmp.eq.s32.totalorder %s33, 1
      %p151 = por %p149, %p150
      %p152 = scmp.ne.s32.totalorder %s143, %s144
      %p153 = scmp.eq.s32.totalorder %s33, 0
      %p154 = por %p152, %p153
      %p155 = scmp.ne.s32.totalorder %s143, %s144
      %p156 = scmp.eq.s32.totalorder %s34, 1
      %p157 = por %p155, %p156
      %p159 = scmp.ne.s32.totalorder %s144, %s158
      %p160 = scmp.eq.s32.totalorder %s34, 0
      %p161 = por %p159, %p160
      %s163 = sadd.s32 %s162, 1
      %p166 = scmp.eq.s32.totalorder %s28, 1
      %p167 = scmp.ne.s32.totalorder %s162, %s164
      %p168 = scmp.eq.s32.totalorder %s28, 0
      %p169 = por %p167, %p168
      %p170 = scmp.ne.s32.totalorder %s162, %s164
      %p171 = scmp.eq.s32.totalorder %s33, 1
      %p172 = por %p170, %p171
      %p173 = scmp.ne.s32.totalorder %s164, %s165
      %p174 = scmp.eq.s32.totalorder %s33, 0
      %p175 = por %p173, %p174
      %p176 = scmp.ne.s32.totalorder %s164, %s165
      %p177 = scmp.eq.s32.totalorder %s34, 1
      %p178 = por %p176, %p177
      %p180 = scmp.ne.s32.totalorder %s165, %s179
      %p181 = scmp.eq.s32.totalorder %s34, 0
      %p182 = por %p180, %p181
      %s184 = sadd.s32 %s183, 1
      %p187 = scmp.eq.s32.totalorder %s28, 1
      %p188 = scmp.ne.s32.totalorder %s183, %s185
      %p189 = scmp.eq.s32.totalorder %s28, 0
      %p190 = por %p188, %p189
      %p191 = scmp.ne.s32.totalorder %s183, %s185
      %p192 = scmp.eq.s32.totalorder %s33, 1
      %p193 = por %p191, %p192
      %p194 = scmp.ne.s32.totalorder %s185, %s186
      %p195 = scmp.eq.s32.totalorder %s33, 0
      %p196 = por %p194, %p195
      %p197 = scmp.ne.s32.totalorder %s185, %s186
      %p198 = scmp.eq.s32.totalorder %s34, 1
      %p199 = por %p197, %p198
      %p201 = scmp.ne.s32.totalorder %s186, %s200
      %p202 = scmp.eq.s32.totalorder %s34, 0
      %p203 = por %p201, %p202
      %s205 = sadd.s32 %s204, 1
      %p208 = scmp.eq.s32.totalorder %s28, 1
      %p209 = scmp.ne.s32.totalorder %s204, %s206
      %p210 = scmp.eq.s32.totalorder %s28, 0
      %p211 = por %p209, %p210
      %p212 = scmp.ne.s32.totalorder %s204, %s206
      %p213 = scmp.eq.s32.totalorder %s33, 1
      %p214 = por %p212, %p213
      %p215 = scmp.ne.s32.totalorder %s206, %s207
      %p216 = scmp.eq.s32.totalorder %s33, 0
      %p217 = por %p215, %p216
      %p218 = scmp.ne.s32.totalorder %s206, %s207
      %p219 = scmp.eq.s32.totalorder %s34, 1
      %p220 = por %p218, %p219
      %p222 = scmp.ne.s32.totalorder %s207, %s221
      %p223 = scmp.eq.s32.totalorder %s34, 0
      %p224 = por %p222, %p223
      %s226 = sadd.s32 %s225, 1
      %p229 = scmp.eq.s32.totalorder %s28, 1
      %p230 = scmp.ne.s32.totalorder %s225, %s227
      %p231 = scmp.eq.s32.totalorder %s28, 0
      %p232 = por %p230, %p231
      %p233 = scmp.ne.s32.totalorder %s225, %s227
      %p234 = scmp.eq.s32.totalorder %s33, 1
      %p235 = por %p233, %p234
      %p236 = scmp.ne.s32.totalorder %s227, %s228
      %p237 = scmp.eq.s32.totalorder %s33, 0
      %p238 = por %p236, %p237
      %p239 = scmp.ne.s32.totalorder %s227, %s228
      %p240 = scmp.eq.s32.totalorder %s34, 1
      %p241 = por %p239, %p240
      %p243 = scmp.ne.s32.totalorder %s228, %s242
      %p244 = scmp.eq.s32.totalorder %s34, 0
      %p245 = por %p243, %p244
      %s247 = sadd.s32 %s246, 1
      %p250 = scmp.eq.s32.totalorder %s28, 1
      %p251 = scmp.ne.s32.totalorder %s246, %s248
      %p252 = scmp.eq.s32.totalorder %s28, 0
      %p253 = por %p251, %p252
      %p254 = scmp.ne.s32.totalorder %s246, %s248
      %p255 = scmp.eq.s32.totalorder %s33, 1
      %p256 = por %p254, %p255
      %p257 = scmp.ne.s32.totalorder %s248, %s249
      %p258 = scmp.eq.s32.totalorder %s33, 0
      %p259 = por %p257, %p258
      %p260 = scmp.ne.s32.totalorder %s248, %s249
      %p261 = scmp.eq.s32.totalorder %s34, 1
      %p262 = por %p260, %p261
      %p264 = scmp.ne.s32.totalorder %s249, %s263
      %p265 = scmp.eq.s32.totalorder %s34, 0
      %p266 = por %p264, %p265
      %s268 = sadd.s32 %s267, 1
      %p271 = scmp.eq.s32.totalorder %s28, 1
      %p272 = scmp.ne.s32.totalorder %s267, %s269
      %p273 = scmp.eq.s32.totalorder %s28, 0
      %p274 = por %p272, %p273
      %p275 = scmp.ne.s32.totalorder %s267, %s269
      %p276 = scmp.eq.s32.totalorder %s33, 1
      %p277 = por %p275, %p276
      %p278 = scmp.ne.s32.totalorder %s269, %s270
      %p279 = scmp.eq.s32.totalorder %s33, 0
      %p280 = por %p278, %p279
      %p281 = scmp.ne.s32.totalorder %s269, %s270
      %p282 = scmp.eq.s32.totalorder %s34, 1
      %p283 = por %p281, %p282
      %p285 = scmp.ne.s32.totalorder %s270, %s284
      %p286 = scmp.eq.s32.totalorder %s34, 0
      %p287 = por %p285, %p286
      %s289 = sadd.s32 %s288, 1
      %p292 = scmp.eq.s32.totalorder %s28, 1
      %p293 = scmp.ne.s32.totalorder %s288, %s290
      %p294 = scmp.eq.s32.totalorder %s28, 0
      %p295 = por %p293, %p294
      %p296 = scmp.ne.s32.totalorder %s288, %s290
      %p297 = scmp.eq.s32.totalorder %s33, 1
      %p298 = por %p296, %p297
      %p299 = scmp.ne.s32.totalorder %s290, %s291
      %p300 = scmp.eq.s32.totalorder %s33, 0
      %p301 = por %p299, %p300
      %p302 = scmp.ne.s32.totalorder %s290, %s291
      %p303 = scmp.eq.s32.totalorder %s34, 1
      %p304 = por %p302, %p303
      %p306 = scmp.ne.s32.totalorder %s291, %s305
      %p307 = scmp.eq.s32.totalorder %s34, 0
      %p308 = por %p306, %p307
      %s310 = sadd.s32 %s309, 1
      %p313 = scmp.eq.s32.totalorder %s28, 1
      %p314 = scmp.ne.s32.totalorder %s309, %s311
      %p315 = scmp.eq.s32.totalorder %s28, 0
      %p316 = por %p314, %p315
      %p317 = scmp.ne.s32.totalorder %s309, %s311
      %p318 = scmp.eq.s32.totalorder %s33, 1
      %p319 = por %p317, %p318
      %p320 = scmp.ne.s32.totalorder %s311, %s312
      %p321 = scmp.eq.s32.totalorder %s33, 0
      %p322 = por %p320, %p321
      %p323 = scmp.ne.s32.totalorder %s311, %s312
      %p324 = scmp.eq.s32.totalorder %s34, 1
      %p325 = por %p323, %p324
      %p327 = scmp.ne.s32.totalorder %s312, %s326
      %p328 = scmp.eq.s32.totalorder %s34, 0
      %p329 = por %p327, %p328
      %s331 = sadd.s32 %s330, 1
      %p334 = scmp.eq.s32.totalorder %s28, 1
      %p335 = scmp.ne.s32.totalorder %s330, %s332
      %p336 = scmp.eq.s32.totalorder %s28, 0
      %p337 = por %p335, %p336
      %p338 = scmp.ne.s32.totalorder %s330, %s332
      %p339 = scmp.eq.s32.totalorder %s33, 1
      %p340 = por %p338, %p339
      %p341 = scmp.ne.s32.totalorder %s332, %s333
      %p342 = scmp.eq.s32.totalorder %s33, 0
      %p343 = por %p341, %p342
      %p344 = scmp.ne.s32.totalorder %s332, %s333
      %p345 = scmp.eq.s32.totalorder %s34, 1
      %p346 = por %p344, %p345
      %p348 = scmp.ne.s32.totalorder %s333, %s347
      %p349 = scmp.eq.s32.totalorder %s34, 0
      %p350 = por %p348, %p349
      %s351 = ssub.s32 %s28, %s35
      %p352 = scmp.eq.s32.totalorder %s351, 0
      %s354 = sadd.s32 %s353, 1
      %s355 = scalar_select %p352, %s353, %s354
      %p358 = pneg %p352
      %p359 = scmp.eq.s32.totalorder %s28, 1
      %p360 = por %p358, %p359
      %p361 = scmp.ne.s32.totalorder %s353, %s356
      %p362 = scmp.eq.s32.totalorder %s28, 0
      %p363 = por %p361, %p362
      %p364 = scmp.ne.s32.totalorder %s353, %s356
      %p365 = scmp.eq.s32.totalorder %s33, 1
      %p366 = por %p364, %p365
      %p367 = scmp.ne.s32.totalorder %s356, %s357
      %p368 = scmp.eq.s32.totalorder %s33, 0
      %p369 = por %p367, %p368
      %p370 = scmp.ne.s32.totalorder %s356, %s357
      %p371 = scmp.eq.s32.totalorder %s34, 1
      %p372 = por %p370, %p371
      %p374 = scmp.ne.s32.totalorder %s357, %s373
      %p375 = scmp.eq.s32.totalorder %s34, 0
      %p376 = por %p374, %p375
      %p377 = scmp.le.s32.totalorder 1, %s28
      %p378 = scmp.lt.s32.totalorder %s28, 3
      %p379 = pnand %p377, %p378
      %p380 = pneg %p379
      // Predicated region
      $region9: #{_lambda_.1} parent=5 // pred_check
        _
      $region10: #{_lambda_.1} parent=5 // pred_check_branch
        %382 = sbr.rel (%p379) target = $region12
      $region11: #{_lambda_.1} parent=5 // pred_region
        %s383 = ssub.s32 %s28, 1
        // Predicated region
        $region13: #{_lambda_.1} parent=11 // pred_check
          %p384 = pneg %p49
        $region14: #{_lambda_.1} parent=11 // pred_check_branch
          %386 = sbr.rel (%p384) target = $region16
        $region15: #{_lambda_.1} parent=11 // pred_region
          %s388 = ssub.s32 32, 32
          %389 = vsyncadd [#allocation3], %s388
          %s391 = sshll.u32 [#allocation2], 4
          %s392 = int_to_ptr.vmem [resolvable:$true] %s391
          %394 = dma.hbm_to_vmem [thread:$0]  %s0, 32, %s392, [#allocation3]
        $region16: #{_lambda_.1} parent=11 // pred_fallthru
          _
        // Predicated region
        $region17: #{_lambda_.1} parent=11 // pred_check
          %p395 = pneg %p70
        $region18: #{_lambda_.1} parent=11 // pred_check_branch
          %397 = sbr.rel (%p395) target = $region20
        $region19: #{_lambda_.1} parent=11 // pred_region
          %s399 = ssub.s32 2048, 2048
          %400 = vsyncadd [#allocation5], %s399
          %s401 = sshll.u32 [#allocation4], 4
          %s402 = int_to_ptr.vmem [resolvable:$true] %s401
          %407 = dma.hbm_to_vmem [thread:$0]  %s1, 2048, %s402, [#allocation5], 512, 512, 32
        $region20: #{_lambda_.1} parent=11 // pred_fallthru
          _
        // Predicated region
        $region21: #{_lambda_.1} parent=11 // pred_check
          %p408 = pneg %p91
        $region22: #{_lambda_.1} parent=11 // pred_check_branch
          %410 = sbr.rel (%p408) target = $region24
        $region23: #{_lambda_.1} parent=11 // pred_region
          %s412 = ssub.s32 1024, 1024
          %413 = vsyncadd [#allocation5], %s412
          %s414 = sshll.u32 [#allocation6], 4
          %s415 = int_to_ptr.vmem [resolvable:$true] %s414
          %420 = dma.hbm_to_vmem [thread:$0]  %s2, 1024, %s415, [#allocation5], 512, 512, 32
        $region24: #{_lambda_.1} parent=11 // pred_fallthru
          _
        // Predicated region
        $region25: #{_lambda_.1} parent=11 // pred_check
          %p421 = pneg %p112
        $region26: #{_lambda_.1} parent=11 // pred_check_branch
          %423 = sbr.rel (%p421) target = $region28
        $region27: #{_lambda_.1} parent=11 // pred_region
          %s425 = ssub.s32 8192, 8192
          %426 = vsyncadd [#allocation8], %s425
          %s427 = sshll.u32 [#allocation7], 4
          %s428 = int_to_ptr.vmem [resolvable:$true] %s427
          %433 = dma.hbm_to_vmem [thread:$0]  %s3, 8192, %s428, [#allocation8], 128, 128, 8
        $region28: #{_lambda_.1} parent=11 // pred_fallthru
          _
        // Predicated region
        $region29: #{_lambda_.1} parent=11 // pred_check
          %p434 = pneg %p133
        $region30: #{_lambda_.1} parent=11 // pred_check_branch
          %436 = sbr.rel (%p434) target = $region32
        $region31: #{_lambda_.1} parent=11 // pred_region
          %s438 = ssub.s32 256, 256
          %439 = vsyncadd [#allocation8], %s438
          %s440 = sshll.u32 [#allocation9], 4
          %s441 = int_to_ptr.vmem [resolvable:$true] %s440
          %446 = dma.hbm_to_vmem [thread:$0]  %s4, 256, %s441, [#allocation8], 128, 128, 8
        $region32: #{_lambda_.1} parent=11 // pred_fallthru
          _
        // Predicated region
        $region33: #{_lambda_.1} parent=11 // pred_check
          %p447 = pneg %p154
        $region34: #{_lambda_.1} parent=11 // pred_check_branch
          %449 = sbr.rel (%p447) target = $region36
        $region35: #{_lambda_.1} parent=11 // pred_region
          %s451 = ssub.s32 512, 512
          %452 = vsyncadd [#allocation11], %s451
          %s453 = sshll.u32 [#allocation10], 4
          %s454 = int_to_ptr.vmem [resolvable:$true] %s453
          %459 = dma.hbm_to_vmem [thread:$0]  %s5, 512, %s454, [#allocation11], 128, 128, 8
        $region36: #{_lambda_.1} parent=11 // pred_fallthru
          _
        // Predicated region
        $region37: #{_lambda_.1} parent=11 // pred_check
          %p460 = pneg %p175
        $region38: #{_lambda_.1} parent=11 // pred_check_branch
          %462 = sbr.rel (%p460) target = $region40
        $region39: #{_lambda_.1} parent=11 // pred_region
          %s464 = ssub.s32 512, 512
          %465 = vsyncadd [#allocation11], %s464
          %s466 = sshll.u32 [#allocation12], 4
          %s467 = int_to_ptr.vmem [resolvable:$true] %s466
          %472 = dma.hbm_to_vmem [thread:$0]  %s6, 512, %s467, [#allocation11], 128, 128, 8
        $region40: #{_lambda_.1} parent=11 // pred_fallthru
          _
        // Predicated region
        $region41: #{_lambda_.1} parent=11 // pred_check
          %p473 = pneg %p196
        $region42: #{_lambda_.1} parent=11 // pred_check_branch
          %475 = sbr.rel (%p473) target = $region44
        $region43: #{_lambda_.1} parent=11 // pred_region
          %s477 = ssub.s32 512, 512
          %478 = vsyncadd [#allocation14], %s477
          %s479 = sshll.u32 [#allocation13], 4
          %s480 = int_to_ptr.vmem [resolvable:$true] %s479
          %485 = dma.hbm_to_vmem [thread:$0]  %s7, 512, %s480, [#allocation14], 128, 128, 8
        $region44: #{_lambda_.1} parent=11 // pred_fallthru
          _
        // Predicated region
        $region45: #{_lambda_.1} parent=11 // pred_check
          %p486 = pneg %p217
        $region46: #{_lambda_.1} parent=11 // pred_check_branch
          %488 = sbr.rel (%p486) target = $region48
        $region47: #{_lambda_.1} parent=11 // pred_region
          %s490 = ssub.s32 16, 16
          %491 = vsyncadd [#allocation14], %s490
          %s493 = sshll.u32 [#allocation15], 4
          %s494 = int_to_ptr.vmem [resolvable:$true] %s493
          %496 = dma.hbm_to_vmem [thread:$0]  %s8, 16, %s494, [#allocation14]
        $region48: #{_lambda_.1} parent=11 // pred_fallthru
          _
        // Predicated region
        $region49: #{_lambda_.1} parent=11 // pred_check
          %p497 = pneg %p238
        $region50: #{_lambda_.1} parent=11 // pred_check_branch
          %499 = sbr.rel (%p497) target = $region52
        $region51: #{_lambda_.1} parent=11 // pred_region
          %s501 = ssub.s32 1024, 1024
          %502 = vsyncadd [#allocation17], %s501
          %s503 = sshll.u32 [#allocation16], 4
          %s504 = int_to_ptr.vmem [resolvable:$true] %s503
          %509 = dma.hbm_to_vmem [thread:$0]  %s9, 1024, %s504, [#allocation17], 128, 128, 8
        $region52: #{_lambda_.1} parent=11 // pred_fallthru
          _
        // Predicated region
        $region53: #{_lambda_.1} parent=11 // pred_check
          %p510 = pneg %p259
        $region54: #{_lambda_.1} parent=11 // pred_check_branch
          %512 = sbr.rel (%p510) target = $region56
        $region55: #{_lambda_.1} parent=11 // pred_region
          %s514 = ssub.s32 1024, 1024
          %515 = vsyncadd [#allocation17], %s514
          %s516 = sshll.u32 [#allocation18], 4
          %s517 = int_to_ptr.vmem [resolvable:$true] %s516
          %522 = dma.hbm_to_vmem [thread:$0]  %s10, 1024, %s517, [#allocation17], 128, 128, 8
        $region56: #{_lambda_.1} parent=11 // pred_fallthru
          _
        // Predicated region
        $region57: #{_lambda_.1} parent=11 // pred_check
          %p523 = pneg %p280
        $region58: #{_lambda_.1} parent=11 // pred_check_branch
          %525 = sbr.rel (%p523) target = $region60
        $region59: #{_lambda_.1} parent=11 // pred_region
          _
        $region60: #{_lambda_.1} parent=11 // pred_fallthru
          _
        // Predicated region
        $region61: #{_lambda_.1} parent=11 // pred_check
          %p526 = pneg %p301
        $region62: #{_lambda_.1} parent=11 // pred_check_branch
          %528 = sbr.rel (%p526) target = $region64
        $region63: #{_lambda_.1} parent=11 // pred_region
          %s530 = ssub.s32 16, 16
          %531 = vsyncadd [#allocation20], %s530
          %s533 = sshll.u32 [#allocation19], 4
          %s534 = int_to_ptr.vmem [resolvable:$true] %s533
          %536 = dma.hbm_to_vmem [thread:$0]  %s12, 16, %s534, [#allocation20]
        $region64: #{_lambda_.1} parent=11 // pred_fallthru
          _
        // Predicated region
        $region65: #{_lambda_.1} parent=11 // pred_check
          %p537 = pneg %p322
        $region66: #{_lambda_.1} parent=11 // pred_check_branch
          %539 = sbr.rel (%p537) target = $region68
        $region67: #{_lambda_.1} parent=11 // pred_region
          _
        $region68: #{_lambda_.1} parent=11 // pred_fallthru
          _
        // Predicated region
        $region69: #{_lambda_.1} parent=11 // pred_check
          %p540 = pneg %p343
        $region70: #{_lambda_.1} parent=11 // pred_check_branch
          %542 = sbr.rel (%p540) target = $region72
        $region71: #{_lambda_.1} parent=11 // pred_region
          _
        $region72: #{_lambda_.1} parent=11 // pred_fallthru
          _
      $region12: #{_lambda_.1} parent=5 // pred_fallthru
        _
      %p543 = scmp.lt.s32.totalorder %s28, 2
      // Predicated region
      $region73: #{_lambda_.1} parent=5 // pred_check
        %p544 = pneg %p543
      $region74: #{_lambda_.1} parent=5 // pred_check_branch
        %546 = sbr.rel (%p544) target = $region76
      $region75: #{_lambda_.1} parent=5 // pred_region
        _
      $region76: #{_lambda_.1} parent=5 // pred_fallthru
        _
      %p547 = scmp.le.s32.totalorder 1, %s28
      %p548 = scmp.lt.s32.totalorder %s28, 3
      %p549 = pnand %p547, %p548
      %p550 = pneg %p549
      // Predicated region
      $region77: #{_lambda_.1} parent=5 // pred_check
        _
      $region78: #{_lambda_.1} parent=5 // pred_check_branch
        %552 = sbr.rel (%p549) target = $region80
      $region79: #{_lambda_.1} parent=5 // pred_region
        %s553 = ssub.s32 %s28, 1
        // Predicated region
        $region81: #{_lambda_.1} parent=79 // pred_check
          %p554 = pneg %p49
        $region82: #{_lambda_.1} parent=79 // pred_check_branch
          %556 = sbr.rel (%p554) target = $region84
        $region83: #{_lambda_.1} parent=79 // pred_region
          %557 = dma.done [#allocation3], 32
        $region84: #{_lambda_.1} parent=79 // pred_fallthru
          _
        // Predicated region
        $region85: #{_lambda_.1} parent=79 // pred_check
          %p558 = pneg %p70
        $region86: #{_lambda_.1} parent=79 // pred_check_branch
          %560 = sbr.rel (%p558) target = $region88
        $region87: #{_lambda_.1} parent=79 // pred_region
          %561 = dma.done [#allocation5], 2048
        $region88: #{_lambda_.1} parent=79 // pred_fallthru
          _
        // Predicated region
        $region89: #{_lambda_.1} parent=79 // pred_check
          %p562 = pneg %p91
        $region90: #{_lambda_.1} parent=79 // pred_check_branch
          %564 = sbr.rel (%p562) target = $region92
        $region91: #{_lambda_.1} parent=79 // pred_region
          %565 = dma.done [#allocation5], 1024
        $region92: #{_lambda_.1} parent=79 // pred_fallthru
          _
        // Predicated region
        $region93: #{_lambda_.1} parent=79 // pred_check
          %p566 = pneg %p112
        $region94: #{_lambda_.1} parent=79 // pred_check_branch
          %568 = sbr.rel (%p566) target = $region96
        $region95: #{_lambda_.1} parent=79 // pred_region
          %569 = dma.done [#allocation8], 8192
        $region96: #{_lambda_.1} parent=79 // pred_fallthru
          _
        // Predicated region
        $region97: #{_lambda_.1} parent=79 // pred_check
          %p570 = pneg %p133
        $region98: #{_lambda_.1} parent=79 // pred_check_branch
          %572 = sbr.rel (%p570) target = $region100
        $region99: #{_lambda_.1} parent=79 // pred_region
          %573 = dma.done [#allocation8], 256
        $region100: #{_lambda_.1} parent=79 // pred_fallthru
          _
        // Predicated region
        $region101: #{_lambda_.1} parent=79 // pred_check
          %p574 = pneg %p154
        $region102: #{_lambda_.1} parent=79 // pred_check_branch
          %576 = sbr.rel (%p574) target = $region104
        $region103: #{_lambda_.1} parent=79 // pred_region
          %577 = dma.done [#allocation11], 512
        $region104: #{_lambda_.1} parent=79 // pred_fallthru
          _
        // Predicated region
        $region105: #{_lambda_.1} parent=79 // pred_check
          %p578 = pneg %p175
        $region106: #{_lambda_.1} parent=79 // pred_check_branch
          %580 = sbr.rel (%p578) target = $region108
        $region107: #{_lambda_.1} parent=79 // pred_region
          %581 = dma.done [#allocation11], 512
        $region108: #{_lambda_.1} parent=79 // pred_fallthru
          _
        // Predicated region
        $region109: #{_lambda_.1} parent=79 // pred_check
          %p582 = pneg %p196
        $region110: #{_lambda_.1} parent=79 // pred_check_branch
          %584 = sbr.rel (%p582) target = $region112
        $region111: #{_lambda_.1} parent=79 // pred_region
          %585 = dma.done [#allocation14], 512
        $region112: #{_lambda_.1} parent=79 // pred_fallthru
          _
        // Predicated region
        $region113: #{_lambda_.1} parent=79 // pred_check
          %p586 = pneg %p217
        $region114: #{_lambda_.1} parent=79 // pred_check_branch
          %588 = sbr.rel (%p586) target = $region116
        $region115: #{_lambda_.1} parent=79 // pred_region
          %589 = dma.done [#allocation14], 16
        $region116: #{_lambda_.1} parent=79 // pred_fallthru
          _
        // Predicated region
        $region117: #{_lambda_.1} parent=79 // pred_check
          %p590 = pneg %p238
        $region118: #{_lambda_.1} parent=79 // pred_check_branch
          %592 = sbr.rel (%p590) target = $region120
        $region119: #{_lambda_.1} parent=79 // pred_region
          %593 = dma.done [#allocation17], 1024
        $region120: #{_lambda_.1} parent=79 // pred_fallthru
          _
        // Predicated region
        $region121: #{_lambda_.1} parent=79 // pred_check
          %p594 = pneg %p259
        $region122: #{_lambda_.1} parent=79 // pred_check_branch
          %596 = sbr.rel (%p594) target = $region124
        $region123: #{_lambda_.1} parent=79 // pred_region
          %597 = dma.done [#allocation17], 1024
        $region124: #{_lambda_.1} parent=79 // pred_fallthru
          _
        // Predicated region
        $region125: #{_lambda_.1} parent=79 // pred_check
          %p598 = pneg %p301
        $region126: #{_lambda_.1} parent=79 // pred_check_branch
          %600 = sbr.rel (%p598) target = $region128
        $region127: #{_lambda_.1} parent=79 // pred_region
          %601 = dma.done [#allocation20], 16
        $region128: #{_lambda_.1} parent=79 // pred_fallthru
          _
        %p602 = pneg %p49
        %p603 = pneg %p46
        %p604 = pneg %p70
        %p605 = pneg %p67
        %p606 = pneg %p91
        %p607 = pneg %p88
        %p608 = pneg %p112
        %p609 = pneg %p109
        %p610 = pneg %p133
        %p611 = pneg %p130
        %p612 = pneg %p154
        %p613 = pneg %p151
        %p614 = pneg %p175
        %p615 = pneg %p172
        %p616 = pneg %p196
        %p617 = pneg %p193
        %p618 = pneg %p217
        %p619 = pneg %p214
        %p620 = pneg %p238
        %p621 = pneg %p235
        %p622 = pneg %p259
        %p623 = pneg %p256
        %p624 = pneg %p280
        %p625 = pneg %p277
        %p626 = pneg %p301
        %p627 = pneg %p298
        %p628 = pneg %p322
        %p629 = pneg %p319
        %p630 = pneg %p343
        %p631 = pneg %p340
        %p632 = pneg %p369
        %p633 = pneg %p366
        %p634 = scmp.lt.s32.totalorder %s33, 1
        %s635 = scalar_select %p634, %s33, 1
        %s636 = smul.addr %s635, 8
        %s637 = smul.addr %s636, 8
        %s638 = scalar_lea.vmem %s15, %s637
        %p639 = scmp.lt.s32.totalorder %s33, 1
        %s640 = scalar_select %p639, %s33, 1
        %s641 = smul.addr %s640, 8
        %s642 = smul.addr %s641, 8
        %s643 = scalar_lea.vmem %s15, %s642
        %s644 = scalar_lea.vmem [#allocation2], %s33
        %v645 = vld [vmem:[%s644] sm:$0x1]
        %v646 = vld [vmem:[#allocation4] sm:$0xff]
        %v647 = vld [vmem:[#allocation4 + $0x8] sm:$0xff]
        %v648 = vld [vmem:[#allocation4 + $0x10] sm:$0xff]
        %v649 = vld [vmem:[#allocation4 + $0x18] sm:$0xff]
        %v650 = vld [vmem:[#allocation4 + $0x20] sm:$0xff]
        %v651 = vld [vmem:[#allocation4 + $0x28] sm:$0xff]
        %v652 = vld [vmem:[#allocation4 + $0x30] sm:$0xff]
        %v653 = vld [vmem:[#allocation4 + $0x38] sm:$0xff]
        %v654 = vld [vmem:[#allocation4 + $0x40] sm:$0xff]
        %v655 = vld [vmem:[#allocation4 + $0x48] sm:$0xff]
        %v656 = vld [vmem:[#allocation4 + $0x50] sm:$0xff]
        %v657 = vld [vmem:[#allocation4 + $0x58] sm:$0xff]
        %v658 = vld [vmem:[#allocation4 + $0x60] sm:$0xff]
        %v659 = vld [vmem:[#allocation4 + $0x68] sm:$0xff]
        %v660 = vld [vmem:[#allocation4 + $0x70] sm:$0xff]
        %v661 = vld [vmem:[#allocation4 + $0x78] sm:$0xff]
        %vm662 = vcmask 261120
        %v664 = vsel %vm662, %v645, 0
        %666 = vmatprep.subr.mxu0 %v647
        %667 = vmatpush1.msra.mxu0 %v646
        %668 = vmatprep.subr.mxu0 %v651
        %669 = vmatpush1.msra.mxu0 %v650
        %670 = vmatprep.subr.mxu0 %v655
        %671 = vmatpush1.msra.mxu0 %v654
        %672 = vmatprep.subr.mxu0 %v659
        %673 = vmatpush1.msra.mxu0 %v658
        %674 = vmatprep.subr.mxu0 0.0
        %675 = vmatpush1.msra.mxu0 0.0
        %676 = vmatprep.subr.mxu0 0.0
        %677 = vmatpush1.msra.mxu0 0.0
        %678 = vmatprep.subr.mxu0 0.0
        %679 = vmatpush1.msra.mxu0 0.0
        %680 = vmatprep.subr.mxu0 0.0
        %681 = vmatpush1.msra.mxu0 0.0
        %682 = vmatprep.subr.mxu0 0.0
        %683 = vmatpush1.msra.mxu0 0.0
        %684 = vmatprep.subr.mxu0 0.0
        %685 = vmatpush1.msra.mxu0 0.0
        %686 = vmatprep.subr.mxu0 0.0
        %687 = vmatpush1.msra.mxu0 0.0
        %688 = vmatprep.subr.mxu0 0.0
        %689 = vmatpush1.msra.mxu0 0.0
        %690 = vmatprep.subr.mxu0 0.0
        %691 = vmatpush1.msra.mxu0 0.0
        %692 = vmatprep.subr.mxu0 0.0
        %693 = vmatpush1.msra.mxu0 0.0
        %694 = vmatprep.subr.mxu0 0.0
        %695 = vmatpush1.msra.mxu0 0.0
        %696 = vmatprep.subr.mxu0 0.0
        %697 = vmatpush1.msra.mxu0 0.0
        %698 = vmatprep.subr.mxu0 0.0
        %699 = vmatpush1.msra.mxu0 0.0
        %700 = vmatprep.subr.mxu0 0.0
        %701 = vmatpush1.msra.mxu0 0.0
        %702 = vmatprep.subr.mxu0 0.0
        %703 = vmatpush1.msra.mxu0 0.0
        %704 = vmatprep.subr.mxu0 0.0
        %705 = vmatpush1.msra.mxu0 0.0
        %706 = vmatprep.subr.mxu0 0.0
        %707 = vmatpush1.msra.mxu0 0.0
        %708 = vmatprep.subr.mxu0 0.0
        %709 = vmatpush1.msra.mxu0 0.0
        %710 = vmatprep.subr.mxu0 0.0
        %711 = vmatpush1.msra.mxu0 0.0
        %712 = vmatprep.subr.mxu0 0.0
        %713 = vmatpush1.msra.mxu0 0.0
        %714 = vmatprep.subr.mxu0 0.0
        %715 = vmatpush1.msra.mxu0 0.0
        %716 = vmatprep.subr.mxu0 0.0
        %717 = vmatpush1.msra.mxu0 0.0
        %718 = vmatprep.subr.mxu0 0.0
        %719 = vmatpush1.msra.mxu0 0.0
        %720 = vmatprep.subr.mxu0 0.0
        %721 = vmatpush1.msra.mxu0 0.0
        %722 = vmatprep.subr.mxu0 0.0
        %723 = vmatpush1.msra.mxu0 0.0
        %724 = vmatprep.subr.mxu0 0.0
        %725 = vmatpush1.msra.mxu0 0.0
        %726 = vmatprep.subr.mxu0 0.0
        %727 = vmatpush1.msra.mxu0 0.0
        %728 = vmatprep.subr.mxu0 0.0
        %729 = vmatpush1.msra.mxu0 0.0
        %730 = vmatprep.mubr.f32.mxu0 0.0
        %731 = vmatmul.mubr.f32.gmra.mrb[0].mxu0 %v664
        %v732 = vpop.f32.mrb[0].mxu0
        %v733 = vadd.f32 0.0, %v732
        %v734 = vpop.f32.mrb[0].mxu0
        %v735 = vadd.f32 0.0, %v734
        %736 = vdwg.mxu0
        %737 = vmatprep.subr.mxu0 %v649
        %738 = vmatpush1.msra.mxu0 %v648
        %739 = vmatprep.subr.mxu0 %v653
        %740 = vmatpush1.msra.mxu0 %v652
        %741 = vmatprep.subr.mxu0 %v657
        %742 = vmatpush1.msra.mxu0 %v656
        %743 = vmatprep.subr.mxu0 %v661
        %744 = vmatpush1.msra.mxu0 %v660
        %745 = vmatprep.subr.mxu0 0.0
        %746 = vmatpush1.msra.mxu0 0.0
        %747 = vmatprep.subr.mxu0 0.0
        %748 = vmatpush1.msra.mxu0 0.0
        %749 = vmatprep.subr.mxu0 0.0
        %750 = vmatpush1.msra.mxu0 0.0
        %751 = vmatprep.subr.mxu0 0.0
        %752 = vmatpush1.msra.mxu0 0.0
        %753 = vmatprep.subr.mxu0 0.0
        %754 = vmatpush1.msra.mxu0 0.0
        %755 = vmatprep.subr.mxu0 0.0
        %756 = vmatpush1.msra.mxu0 0.0
        %757 = vmatprep.subr.mxu0 0.0
        %758 = vmatpush1.msra.mxu0 0.0
        %759 = vmatprep.subr.mxu0 0.0
        %760 = vmatpush1.msra.mxu0 0.0
        %761 = vmatprep.subr.mxu0 0.0
        %762 = vmatpush1.msra.mxu0 0.0
        %763 = vmatprep.subr.mxu0 0.0
        %764 = vmatpush1.msra.mxu0 0.0
        %765 = vmatprep.subr.mxu0 0.0
        %766 = vmatpush1.msra.mxu0 0.0
        %767 = vmatprep.subr.mxu0 0.0
        %768 = vmatpush1.msra.mxu0 0.0
        %769 = vmatprep.subr.mxu0 0.0
        %770 = vmatpush1.msra.mxu0 0.0
        %771 = vmatprep.subr.mxu0 0.0
        %772 = vmatpush1.msra.mxu0 0.0
        %773 = vmatprep.subr.mxu0 0.0
        %774 = vmatpush1.msra.mxu0 0.0
        %775 = vmatprep.subr.mxu0 0.0
        %776 = vmatpush1.msra.mxu0 0.0
        %777 = vmatprep.subr.mxu0 0.0
        %778 = vmatpush1.msra.mxu0 0.0
        %779 = vmatprep.subr.mxu0 0.0
        %780 = vmatpush1.msra.mxu0 0.0
        %781 = vmatprep.subr.mxu0 0.0
        %782 = vmatpush1.msra.mxu0 0.0
        %783 = vmatprep.subr.mxu0 0.0
        %784 = vmatpush1.msra.mxu0 0.0
        %785 = vmatprep.subr.mxu0 0.0
        %786 = vmatpush1.msra.mxu0 0.0
        %787 = vmatprep.subr.mxu0 0.0
        %788 = vmatpush1.msra.mxu0 0.0
        %789 = vmatprep.subr.mxu0 0.0
        %790 = vmatpush1.msra.mxu0 0.0
        %791 = vmatprep.subr.mxu0 0.0
        %792 = vmatpush1.msra.mxu0 0.0
        %793 = vmatprep.subr.mxu0 0.0
        %794 = vmatpush1.msra.mxu0 0.0
        %795 = vmatprep.subr.mxu0 0.0
        %796 = vmatpush1.msra.mxu0 0.0
        %797 = vmatprep.subr.mxu0 0.0
        %798 = vmatpush1.msra.mxu0 0.0
        %799 = vmatprep.subr.mxu0 0.0
        %800 = vmatpush1.msra.mxu0 0.0
        %801 = vmatprep.mubr.f32.mxu0 0.0
        %802 = vmatmul.mubr.f32.gmra.mrb[0].mxu0 %v664
        %v803 = vpop.f32.mrb[0].mxu0
        %v804 = vadd.f32 0.0, %v803
        %v805 = vpop.f32.mrb[0].mxu0
        %v806 = vadd.f32 0.0, %v805
        %807 = vdwg.mxu0
        %v808 = vld [vmem:[#allocation6] sm:$0xff]
        %v809 = vld [vmem:[#allocation6 + $0x8] sm:$0xff]
        %v810 = vld [vmem:[#allocation6 + $0x10] sm:$0xff]
        %v811 = vld [vmem:[#allocation6 + $0x18] sm:$0xff]
        %v812 = vld [vmem:[#allocation6 + $0x20] sm:$0xff]
        %v813 = vld [vmem:[#allocation6 + $0x28] sm:$0xff]
        %v814 = vld [vmem:[#allocation6 + $0x30] sm:$0xff]
        %v815 = vld [vmem:[#allocation6 + $0x38] sm:$0xff]
        %v816 = vlaneseq
        %v817 = vshrl.u32 %v816, 7
        %v818 = vsub.s32 0, %v817
        %v819 = vrot.slane %v733, %v818
        %v820 = vlaneseq
        %v821 = vshrl.u32 %v820, 7
        %v822 = vsub.s32 0, %v821
        %v823 = vrot.slane %v735, %v822
        %v824 = vlaneseq
        %v825 = vshrl.u32 %v824, 7
        %v826 = vsub.s32 0, %v825
        %v827 = vrot.slane %v804, %v826
        %v828 = vlaneseq
        %v829 = vshrl.u32 %v828, 7
        %v830 = vsub.s32 0, %v829
        %v831 = vrot.slane %v806, %v830
        %v832 = vmul.f32 %v808, %v819
        %v833 = vmul.f32 %v809, %v823
        %v834 = vmul.f32 %v810, %v827
        %v835 = vmul.f32 %v811, %v831
        %v836 = vmul.f32 %v812, %v819
        %v837 = vmul.f32 %v813, %v823
        %v838 = vmul.f32 %v814, %v827
        %v839 = vmul.f32 %v815, %v831
        %v840 = vld [vmem:[#allocation7] sm:$0xff]
        %v841 = vld [vmem:[#allocation7 + $0x8] sm:$0xff]
        %v842 = vld [vmem:[#allocation7 + $0x10] sm:$0xff]
        %v843 = vld [vmem:[#allocation7 + $0x18] sm:$0xff]
        %v844 = vld [vmem:[#allocation7 + $0x20] sm:$0xff]
        %v845 = vld [vmem:[#allocation7 + $0x28] sm:$0xff]
        %v846 = vld [vmem:[#allocation7 + $0x30] sm:$0xff]
        %v847 = vld [vmem:[#allocation7 + $0x38] sm:$0xff]
        %v848 = vld [vmem:[#allocation7 + $0x40] sm:$0xff]
        %v849 = vld [vmem:[#allocation7 + $0x48] sm:$0xff]
        %v850 = vld [vmem:[#allocation7 + $0x50] sm:$0xff]
        %v851 = vld [vmem:[#allocation7 + $0x58] sm:$0xff]
        %v852 = vld [vmem:[#allocation7 + $0x60] sm:$0xff]
        %v853 = vld [vmem:[#allocation7 + $0x68] sm:$0xff]
        %v854 = vld [vmem:[#allocation7 + $0x70] sm:$0xff]
        %v855 = vld [vmem:[#allocation7 + $0x78] sm:$0xff]
        %v856 = vld [vmem:[#allocation7 + $0x80] sm:$0xff]
        %v857 = vld [vmem:[#allocation7 + $0x88] sm:$0xff]
        %v858 = vld [vmem:[#allocation7 + $0x90] sm:$0xff]
        %v859 = vld [vmem:[#allocation7 + $0x98] sm:$0xff]
        %v860 = vld [vmem:[#allocation7 + $0xa0] sm:$0xff]
        %v861 = vld [vmem:[#allocation7 + $0xa8] sm:$0xff]
        %v862 = vld [vmem:[#allocation7 + $0xb0] sm:$0xff]
        %v863 = vld [vmem:[#allocation7 + $0xb8] sm:$0xff]
        %v864 = vld [vmem:[#allocation7 + $0xc0] sm:$0xff]
        %v865 = vld [vmem:[#allocation7 + $0xc8] sm:$0xff]
        %v866 = vld [vmem:[#allocation7 + $0xd0] sm:$0xff]
        %v867 = vld [vmem:[#allocation7 + $0xd8] sm:$0xff]
        %v868 = vld [vmem:[#allocation7 + $0xe0] sm:$0xff]
        %v869 = vld [vmem:[#allocation7 + $0xe8] sm:$0xff]
        %v870 = vld [vmem:[#allocation7 + $0xf0] sm:$0xff]
        %v871 = vld [vmem:[#allocation7 + $0xf8] sm:$0xff]
        %v872 = vld [vmem:[#allocation7 + $0x100] sm:$0xff]
        %v873 = vld [vmem:[#allocation7 + $0x108] sm:$0xff]
        %v874 = vld [vmem:[#allocation7 + $0x110] sm:$0xff]
        %v875 = vld [vmem:[#allocation7 + $0x118] sm:$0xff]
        %v876 = vld [vmem:[#allocation7 + $0x120] sm:$0xff]
        %v877 = vld [vmem:[#allocation7 + $0x128] sm:$0xff]
        %v878 = vld [vmem:[#allocation7 + $0x130] sm:$0xff]
        %v879 = vld [vmem:[#allocation7 + $0x138] sm:$0xff]
        %v880 = vld [vmem:[#allocation7 + $0x140] sm:$0xff]
        %v881 = vld [vmem:[#allocation7 + $0x148] sm:$0xff]
        %v882 = vld [vmem:[#allocation7 + $0x150] sm:$0xff]
        %v883 = vld [vmem:[#allocation7 + $0x158] sm:$0xff]
        %v884 = vld [vmem:[#allocation7 + $0x160] sm:$0xff]
        %v885 = vld [vmem:[#allocation7 + $0x168] sm:$0xff]
        %v886 = vld [vmem:[#allocation7 + $0x170] sm:$0xff]
        %v887 = vld [vmem:[#allocation7 + $0x178] sm:$0xff]
        %v888 = vld [vmem:[#allocation7 + $0x180] sm:$0xff]
        %v889 = vld [vmem:[#allocation7 + $0x188] sm:$0xff]
        %v890 = vld [vmem:[#allocation7 + $0x190] sm:$0xff]
        %v891 = vld [vmem:[#allocation7 + $0x198] sm:$0xff]
        %v892 = vld [vmem:[#allocation7 + $0x1a0] sm:$0xff]
        %v893 = vld [vmem:[#allocation7 + $0x1a8] sm:$0xff]
        %v894 = vld [vmem:[#allocation7 + $0x1b0] sm:$0xff]
        %v895 = vld [vmem:[#allocation7 + $0x1b8] sm:$0xff]
        %v896 = vld [vmem:[#allocation7 + $0x1c0] sm:$0xff]
        %v897 = vld [vmem:[#allocation7 + $0x1c8] sm:$0xff]
        %v898 = vld [vmem:[#allocation7 + $0x1d0] sm:$0xff]
        %v899 = vld [vmem:[#allocation7 + $0x1d8] sm:$0xff]
        %v900 = vld [vmem:[#allocation7 + $0x1e0] sm:$0xff]
        %v901 = vld [vmem:[#allocation7 + $0x1e8] sm:$0xff]
        %v902 = vld [vmem:[#allocation7 + $0x1f0] sm:$0xff]
        %v903 = vld [vmem:[#allocation7 + $0x1f8] sm:$0xff]
        %v904 = vld [vmem:[#allocation9] sm:$0xff]
        %v905 = vld [vmem:[#allocation9 + $0x8] sm:$0xff]
        %906 = vmatprep.subr.mxu0 0.0
        %907 = vmatpush1.msra.mxu0 %v840
        %908 = vmatprep.subr.mxu0 0.0
        %909 = vmatpush1.msra.mxu0 %v841
        %910 = vmatprep.subr.mxu0 0.0
        %911 = vmatpush1.msra.mxu0 %v842
        %912 = vmatprep.subr.mxu0 0.0
        %913 = vmatpush1.msra.mxu0 %v843
        %914 = vmatprep.subr.mxu0 0.0
        %915 = vmatpush1.msra.mxu0 %v844
        %916 = vmatprep.subr.mxu0 0.0
        %917 = vmatpush1.msra.mxu0 %v845
        %918 = vmatprep.subr.mxu0 0.0
        %919 = vmatpush1.msra.mxu0 %v846
        %920 = vmatprep.subr.mxu0 0.0
        %921 = vmatpush1.msra.mxu0 %v847
        %922 = vmatprep.subr.mxu0 0.0
        %923 = vmatpush1.msra.mxu0 %v848
        %924 = vmatprep.subr.mxu0 0.0
        %925 = vmatpush1.msra.mxu0 %v849
        %926 = vmatprep.subr.mxu0 0.0
        %927 = vmatpush1.msra.mxu0 %v850
        %928 = vmatprep.subr.mxu0 0.0
        %929 = vmatpush1.msra.mxu0 %v851
        %930 = vmatprep.subr.mxu0 0.0
        %931 = vmatpush1.msra.mxu0 %v852
        %932 = vmatprep.subr.mxu0 0.0
        %933 = vmatpush1.msra.mxu0 %v853
        %934 = vmatprep.subr.mxu0 0.0
        %935 = vmatpush1.msra.mxu0 %v854
        %936 = vmatprep.subr.mxu0 0.0
        %937 = vmatpush1.msra.mxu0 %v855
        %938 = vmatprep.subr.mxu0 0.0
        %939 = vmatpush1.msra.mxu0 %v856
        %940 = vmatprep.subr.mxu0 0.0
        %941 = vmatpush1.msra.mxu0 %v857
        %942 = vmatprep.subr.mxu0 0.0
        %943 = vmatpush1.msra.mxu0 %v858
        %944 = vmatprep.subr.mxu0 0.0
        %945 = vmatpush1.msra.mxu0 %v859
        %946 = vmatprep.subr.mxu0 0.0
        %947 = vmatpush1.msra.mxu0 %v860
        %948 = vmatprep.subr.mxu0 0.0
        %949 = vmatpush1.msra.mxu0 %v861
        %950 = vmatprep.subr.mxu0 0.0
        %951 = vmatpush1.msra.mxu0 %v862
        %952 = vmatprep.subr.mxu0 0.0
        %953 = vmatpush1.msra.mxu0 %v863
        %954 = vmatprep.subr.mxu0 0.0
        %955 = vmatpush1.msra.mxu0 %v864
        %956 = vmatprep.subr.mxu0 0.0
        %957 = vmatpush1.msra.mxu0 %v865
        %958 = vmatprep.subr.mxu0 0.0
        %959 = vmatpush1.msra.mxu0 %v866
        %960 = vmatprep.subr.mxu0 0.0
        %961 = vmatpush1.msra.mxu0 %v867
        %962 = vmatprep.subr.mxu0 0.0
        %963 = vmatpush1.msra.mxu0 %v868
        %964 = vmatprep.subr.mxu0 0.0
        %965 = vmatpush1.msra.mxu0 %v869
        %966 = vmatprep.subr.mxu0 0.0
        %967 = vmatpush1.msra.mxu0 %v870
        %968 = vmatprep.subr.mxu0 0.0
        %969 = vmatpush1.msra.mxu0 %v871
        %970 = vmatprep.mubr.f32.mxu0 %v833
        %971 = vmatmul.mubr.f32.gmra.mrb[0].mxu0 %v832
        %v972 = vpop.f32.mrb[0].mxu0
        %v973 = vadd.f32 %v904, %v972
        %v974 = vpop.f32.mrb[0].mxu0
        %975 = vmatprep.mubr.f32.mxu0 %v837
        %976 = vmatmul.mubr.f32.gmra.mrb[0].mxu0 %v836
        %v977 = vpop.f32.mrb[0].mxu0
        %v978 = vadd.f32 %v905, %v977
        %v979 = vpop.f32.mrb[0].mxu0
        %980 = vdwg.mxu0
        %981 = vmatprep.subr.mxu0 0.0
        %982 = vmatpush1.msra.mxu0 %v872
        %983 = vmatprep.subr.mxu0 0.0
        %984 = vmatpush1.msra.mxu0 %v873
        %985 = vmatprep.subr.mxu0 0.0
        %986 = vmatpush1.msra.mxu0 %v874
        %987 = vmatprep.subr.mxu0 0.0
        %988 = vmatpush1.msra.mxu0 %v875
        %989 = vmatprep.subr.mxu0 0.0
        %990 = vmatpush1.msra.mxu0 %v876
        %991 = vmatprep.subr.mxu0 0.0
        %992 = vmatpush1.msra.mxu0 %v877
        %993 = vmatprep.subr.mxu0 0.0
        %994 = vmatpush1.msra.mxu0 %v878
        %995 = vmatprep.subr.mxu0 0.0
        %996 = vmatpush1.msra.mxu0 %v879
        %997 = vmatprep.subr.mxu0 0.0
        %998 = vmatpush1.msra.mxu0 %v880
        %999 = vmatprep.subr.mxu0 0.0
        %1000 = vmatpush1.msra.mxu0 %v881
        %1001 = vmatprep.subr.mxu0 0.0
        %1002 = vmatpush1.msra.mxu0 %v882
        %1003 = vmatprep.subr.mxu0 0.0
        %1004 = vmatpush1.msra.mxu0 %v883
        %1005 = vmatprep.subr.mxu0 0.0
        %1006 = vmatpush1.msra.mxu0 %v884
        %1007 = vmatprep.subr.mxu0 0.0
        %1008 = vmatpush1.msra.mxu0 %v885
        %1009 = vmatprep.subr.mxu0 0.0
        %1010 = vmatpush1.msra.mxu0 %v886
        %1011 = vmatprep.subr.mxu0 0.0
        %1012 = vmatpush1.msra.mxu0 %v887
        %1013 = vmatprep.subr.mxu0 0.0
        %1014 = vmatpush1.msra.mxu0 %v888
        %1015 = vmatprep.subr.mxu0 0.0
        %1016 = vmatpush1.msra.mxu0 %v889
        %1017 = vmatprep.subr.mxu0 0.0
        %1018 = vmatpush1.msra.mxu0 %v890
        %1019 = vmatprep.subr.mxu0 0.0
        %1020 = vmatpush1.msra.mxu0 %v891
        %1021 = vmatprep.subr.mxu0 0.0
        %1022 = vmatpush1.msra.mxu0 %v892
        %1023 = vmatprep.subr.mxu0 0.0
        %1024 = vmatpush1.msra.mxu0 %v893
        %1025 = vmatprep.subr.mxu0 0.0
        %1026 = vmatpush1.msra.mxu0 %v894
        %1027 = vmatprep.subr.mxu0 0.0
        %1028 = vmatpush1.msra.mxu0 %v895
        %1029 = vmatprep.subr.mxu0 0.0
        %1030 = vmatpush1.msra.mxu0 %v896
        %1031 = vmatprep.subr.mxu0 0.0
        %1032 = vmatpush1.msra.mxu0 %v897
        %1033 = vmatprep.subr.mxu0 0.0
        %1034 = vmatpush1.msra.mxu0 %v898
        %1035 = vmatprep.subr.mxu0 0.0
        %1036 = vmatpush1.msra.mxu0 %v899
        %1037 = vmatprep.subr.mxu0 0.0
        %1038 = vmatpush1.msra.mxu0 %v900
        %1039 = vmatprep.subr.mxu0 0.0
        %1040 = vmatpush1.msra.mxu0 %v901
        %1041 = vmatprep.subr.mxu0 0.0
        %1042 = vmatpush1.msra.mxu0 %v902
        %1043 = vmatprep.subr.mxu0 0.0
        %1044 = vmatpush1.msra.mxu0 %v903
        %1045 = vmatprep.mubr.f32.mxu0 %v835
        %1046 = vmatmul.mubr.f32.gmra.mrb[0].mxu0 %v834
        %v1047 = vpop.f32.mrb[0].mxu0
        %v1048 = vadd.f32 %v973, %v1047
        %v1049 = vpop.f32.mrb[0].mxu0
        %1050 = vmatprep.mubr.f32.mxu0 %v839
        %1051 = vmatmul.mubr.f32.gmra.mrb[0].mxu0 %v838
        %v1052 = vpop.f32.mrb[0].mxu0
        %v1053 = vadd.f32 %v978, %v1052
        %v1054 = vpop.f32.mrb[0].mxu0
        %1055 = vdwg.mxu0
        %v1056 = vld [vmem:[#allocation10] sm:$0xff]
        %v1057 = vld [vmem:[#allocation10 + $0x8] sm:$0xff]
        %v1058 = vld [vmem:[#allocation10 + $0x10] sm:$0xff]
        %v1059 = vld [vmem:[#allocation10 + $0x18] sm:$0xff]
        %vm1060 = vcmask 130048
        %v1062 = vsel %vm1060, %v1056, 0
        %v1065 = vsel %vm1060, %v1057, 0
        %v1068 = vsel %vm1060, %v1058, 0
        %v1071 = vsel %vm1060, %v1059, 0
        %1073 = vmatprep.subr.mxu0 0.0
        %1074 = vmatpush1.msra.mxu0 %v1048
        %1075 = vmatprep.subr.mxu0 0.0
        %1076 = vmatpush1.msra.mxu0 %v1053
        %1077 = vmatprep.subr.mxu0 0.0
        %1078 = vmatpush1.msra.mxu0 0.0
        %1079 = vmatprep.subr.mxu0 0.0
        %1080 = vmatpush1.msra.mxu0 0.0
        %1081 = vmatprep.subr.mxu0 0.0
        %1082 = vmatpush1.msra.mxu0 0.0
        %1083 = vmatprep.subr.mxu0 0.0
        %1084 = vmatpush1.msra.mxu0 0.0
        %1085 = vmatprep.subr.mxu0 0.0
        %1086 = vmatpush1.msra.mxu0 0.0
        %1087 = vmatprep.subr.mxu0 0.0
        %1088 = vmatpush1.msra.mxu0 0.0
        %1089 = vmatprep.subr.mxu0 0.0
        %1090 = vmatpush1.msra.mxu0 0.0
        %1091 = vmatprep.subr.mxu0 0.0
        %1092 = vmatpush1.msra.mxu0 0.0
        %1093 = vmatprep.subr.mxu0 0.0
        %1094 = vmatpush1.msra.mxu0 0.0
        %1095 = vmatprep.subr.mxu0 0.0
        %1096 = vmatpush1.msra.mxu0 0.0
        %1097 = vmatprep.subr.mxu0 0.0
        %1098 = vmatpush1.msra.mxu0 0.0
        %1099 = vmatprep.subr.mxu0 0.0
        %1100 = vmatpush1.msra.mxu0 0.0
        %1101 = vmatprep.subr.mxu0 0.0
        %1102 = vmatpush1.msra.mxu0 0.0
        %1103 = vmatprep.subr.mxu0 0.0
        %1104 = vmatpush1.msra.mxu0 0.0
        %1105 = vmatprep.subr.mxu0 0.0
        %1106 = vmatpush1.msra.mxu0 0.0
        %1107 = vmatprep.subr.mxu0 0.0
        %1108 = vmatpush1.msra.mxu0 0.0
        %1109 = vmatprep.subr.mxu0 0.0
        %1110 = vmatpush1.msra.mxu0 0.0
        %1111 = vmatprep.subr.mxu0 0.0
        %1112 = vmatpush1.msra.mxu0 0.0
        %1113 = vmatprep.subr.mxu0 0.0
        %1114 = vmatpush1.msra.mxu0 0.0
        %1115 = vmatprep.subr.mxu0 0.0
        %1116 = vmatpush1.msra.mxu0 0.0
        %1117 = vmatprep.subr.mxu0 0.0
        %1118 = vmatpush1.msra.mxu0 0.0
        %1119 = vmatprep.subr.mxu0 0.0
        %1120 = vmatpush1.msra.mxu0 0.0
        %1121 = vmatprep.subr.mxu0 0.0
        %1122 = vmatpush1.msra.mxu0 0.0
        %1123 = vmatprep.subr.mxu0 0.0
        %1124 = vmatpush1.msra.mxu0 0.0
        %1125 = vmatprep.subr.mxu0 0.0
        %1126 = vmatpush1.msra.mxu0 0.0
        %1127 = vmatprep.subr.mxu0 0.0
        %1128 = vmatpush1.msra.mxu0 0.0
        %1129 = vmatprep.subr.mxu0 0.0
        %1130 = vmatpush1.msra.mxu0 0.0
        %1131 = vmatprep.subr.mxu0 0.0
        %1132 = vmatpush1.msra.mxu0 0.0
        %1133 = vmatprep.subr.mxu0 0.0
        %1134 = vmatpush1.msra.mxu0 0.0
        %1135 = vmatprep.subr.mxu0 0.0
        %1136 = vmatpush1.msra.mxu0 0.0
        %1137 = vmatprep.mubr.f32.mxu0 0.0
        %1138 = vmatmul.mubr.f32.gmra.mrb[0].mxu0 %v1062
        %v1139 = vpop.f32.mrb[0].mxu0
        %v1140 = vadd.f32 0.0, %v1139
        %v1141 = vpop.f32.mrb[0].mxu0
        %1142 = vmatprep.mubr.f32.mxu0 0.0
        %1143 = vmatmul.mubr.f32.gmra.mrb[0].mxu0 %v1065
        %v1144 = vpop.f32.mrb[0].mxu0
        %v1145 = vadd.f32 0.0, %v1144
        %v1146 = vpop.f32.mrb[0].mxu0
        %1147 = vmatprep.mubr.f32.mxu0 0.0
        %1148 = vmatmul.mubr.f32.gmra.mrb[0].mxu0 %v1068
        %v1149 = vpop.f32.mrb[0].mxu0
        %v1150 = vadd.f32 0.0, %v1149
        %v1151 = vpop.f32.mrb[0].mxu0
        %1152 = vmatprep.mubr.f32.mxu0 0.0
        %1153 = vmatmul.mubr.f32.gmra.mrb[0].mxu0 %v1071
        %v1154 = vpop.f32.mrb[0].mxu0
        %v1155 = vadd.f32 0.0, %v1154
        %v1156 = vpop.f32.mrb[0].mxu0
        %1157 = vdwg.mxu0
        %v1158 = vld [vmem:[#allocation12] sm:$0xff]
        %v1159 = vld [vmem:[#allocation12 + $0x8] sm:$0xff]
        %v1160 = vld [vmem:[#allocation12 + $0x10] sm:$0xff]
        %v1161 = vld [vmem:[#allocation12 + $0x18] sm:$0xff]
        %v1162 = vld [vmem:[#allocation13] sm:$0xff]
        %v1163 = vld [vmem:[#allocation13 + $0x8] sm:$0xff]
        %v1164 = vld [vmem:[#allocation13 + $0x10] sm:$0xff]
        %v1165 = vld [vmem:[#allocation13 + $0x18] sm:$0xff]
        %v1167 = vsel %vm662, %v1140, 0
        %v1170 = vsel %vm662, %v1145, 0
        %v1173 = vsel %vm662, %v1150, 0
        %v1176 = vsel %vm662, %v1155, 0
        %1178 = vmatprep.subr.mxu0 0.0
        %1179 = vmatpush1.msra.mxu0 %v1162
        %1180 = vmatprep.subr.mxu0 0.0
        %1181 = vmatpush1.msra.mxu0 %v1163
        %1182 = vmatprep.subr.mxu0 0.0
        %1183 = vmatpush1.msra.mxu0 %v1164
        %1184 = vmatprep.subr.mxu0 0.0
        %1185 = vmatpush1.msra.mxu0 %v1165
        %1186 = vmatprep.subr.mxu0 0.0
        %1187 = vmatpush1.msra.mxu0 0.0
        %1188 = vmatprep.subr.mxu0 0.0
        %1189 = vmatpush1.msra.mxu0 0.0
        %1190 = vmatprep.subr.mxu0 0.0
        %1191 = vmatpush1.msra.mxu0 0.0
        %1192 = vmatprep.subr.mxu0 0.0
        %1193 = vmatpush1.msra.mxu0 0.0
        %1194 = vmatprep.subr.mxu0 0.0
        %1195 = vmatpush1.msra.mxu0 0.0
        %1196 = vmatprep.subr.mxu0 0.0
        %1197 = vmatpush1.msra.mxu0 0.0
        %1198 = vmatprep.subr.mxu0 0.0
        %1199 = vmatpush1.msra.mxu0 0.0
        %1200 = vmatprep.subr.mxu0 0.0
        %1201 = vmatpush1.msra.mxu0 0.0
        %1202 = vmatprep.subr.mxu0 0.0
        %1203 = vmatpush1.msra.mxu0 0.0
        %1204 = vmatprep.subr.mxu0 0.0
        %1205 = vmatpush1.msra.mxu0 0.0
        %1206 = vmatprep.subr.mxu0 0.0
        %1207 = vmatpush1.msra.mxu0 0.0
        %1208 = vmatprep.subr.mxu0 0.0
        %1209 = vmatpush1.msra.mxu0 0.0
        %1210 = vmatprep.subr.mxu0 0.0
        %1211 = vmatpush1.msra.mxu0 0.0
        %1212 = vmatprep.subr.mxu0 0.0
        %1213 = vmatpush1.msra.mxu0 0.0
        %1214 = vmatprep.subr.mxu0 0.0
        %1215 = vmatpush1.msra.mxu0 0.0
        %1216 = vmatprep.subr.mxu0 0.0
        %1217 = vmatpush1.msra.mxu0 0.0
        %1218 = vmatprep.subr.mxu0 0.0
        %1219 = vmatpush1.msra.mxu0 0.0
        %1220 = vmatprep.subr.mxu0 0.0
        %1221 = vmatpush1.msra.mxu0 0.0
        %1222 = vmatprep.subr.mxu0 0.0
        %1223 = vmatpush1.msra.mxu0 0.0
        %1224 = vmatprep.subr.mxu0 0.0
        %1225 = vmatpush1.msra.mxu0 0.0
        %1226 = vmatprep.subr.mxu0 0.0
        %1227 = vmatpush1.msra.mxu0 0.0
        %1228 = vmatprep.subr.mxu0 0.0
        %1229 = vmatpush1.msra.mxu0 0.0
        %1230 = vmatprep.subr.mxu0 0.0
        %1231 = vmatpush1.msra.mxu0 0.0
        %1232 = vmatprep.subr.mxu0 0.0
        %1233 = vmatpush1.msra.mxu0 0.0
        %1234 = vmatprep.subr.mxu0 0.0
        %1235 = vmatpush1.msra.mxu0 0.0
        %1236 = vmatprep.subr.mxu0 0.0
        %1237 = vmatpush1.msra.mxu0 0.0
        %1238 = vmatprep.subr.mxu0 0.0
        %1239 = vmatpush1.msra.mxu0 0.0
        %1240 = vmatprep.subr.mxu0 0.0
        %1241 = vmatpush1.msra.mxu0 0.0
        %1242 = vmatprep.mubr.f32.mxu0 0.0
        %1243 = vmatmul.mubr.f32.gmra.mrb[0].mxu0 %v1167
        %v1244 = vpop.f32.mrb[0].mxu0
        %v1245 = vadd.f32 0.0, %v1244
        %v1246 = vpop.f32.mrb[0].mxu0
        %1247 = vmatprep.mubr.f32.mxu0 0.0
        %1248 = vmatmul.mubr.f32.gmra.mrb[0].mxu0 %v1170
        %v1249 = vpop.f32.mrb[0].mxu0
        %v1250 = vadd.f32 0.0, %v1249
        %v1251 = vpop.f32.mrb[0].mxu0
        %1252 = vmatprep.mubr.f32.mxu0 0.0
        %1253 = vmatmul.mubr.f32.gmra.mrb[0].mxu0 %v1173
        %v1254 = vpop.f32.mrb[0].mxu0
        %v1255 = vadd.f32 0.0, %v1254
        %v1256 = vpop.f32.mrb[0].mxu0
        %1257 = vmatprep.mubr.f32.mxu0 0.0
        %1258 = vmatmul.mubr.f32.gmra.mrb[0].mxu0 %v1176
        %v1259 = vpop.f32.mrb[0].mxu0
        %v1260 = vadd.f32 0.0, %v1259
        %v1261 = vpop.f32.mrb[0].mxu0
        %1262 = vdwg.mxu0
        %v1263 = vld [vmem:[#allocation15] sm:$0x1]
        %v1265 = vlaneseq
        %v1266 = vshrl.u32 %v1265, 7
        %v1267 = vsub.s32 0, %v1266
        %v1268 = vrot.slane %v1263, %v1267
        %v1271 = vsel %vm662, %v1158, 0
        %v1274 = vsel %vm662, %v1159, 0
        %v1277 = vsel %vm662, %v1160, 0
        %v1280 = vsel %vm662, %v1161, 0
        %1282 = vmatprep.subr.mxu0 0.0
        %1283 = vmatpush1.msra.mxu0 %v1245
        %1284 = vmatprep.subr.mxu0 0.0
        %1285 = vmatpush1.msra.mxu0 %v1250
        %1286 = vmatprep.subr.mxu0 0.0
        %1287 = vmatpush1.msra.mxu0 %v1255
        %1288 = vmatprep.subr.mxu0 0.0
        %1289 = vmatpush1.msra.mxu0 %v1260
        %1290 = vmatprep.subr.mxu0 0.0
        %1291 = vmatpush1.msra.mxu0 0.0
        %1292 = vmatprep.subr.mxu0 0.0
        %1293 = vmatpush1.msra.mxu0 0.0
        %1294 = vmatprep.subr.mxu0 0.0
        %1295 = vmatpush1.msra.mxu0 0.0
        %1296 = vmatprep.subr.mxu0 0.0
        %1297 = vmatpush1.msra.mxu0 0.0
        %1298 = vmatprep.subr.mxu0 0.0
        %1299 = vmatpush1.msra.mxu0 0.0
        %1300 = vmatprep.subr.mxu0 0.0
        %1301 = vmatpush1.msra.mxu0 0.0
        %1302 = vmatprep.subr.mxu0 0.0
        %1303 = vmatpush1.msra.mxu0 0.0
        %1304 = vmatprep.subr.mxu0 0.0
        %1305 = vmatpush1.msra.mxu0 0.0
        %1306 = vmatprep.subr.mxu0 0.0
        %1307 = vmatpush1.msra.mxu0 0.0
        %1308 = vmatprep.subr.mxu0 0.0
        %1309 = vmatpush1.msra.mxu0 0.0
        %1310 = vmatprep.subr.mxu0 0.0
        %1311 = vmatpush1.msra.mxu0 0.0
        %1312 = vmatprep.subr.mxu0 0.0
        %1313 = vmatpush1.msra.mxu0 0.0
        %1314 = vmatprep.subr.mxu0 0.0
        %1315 = vmatpush1.msra.mxu0 0.0
        %1316 = vmatprep.subr.mxu0 0.0
        %1317 = vmatpush1.msra.mxu0 0.0
        %1318 = vmatprep.subr.mxu0 0.0
        %1319 = vmatpush1.msra.mxu0 0.0
        %1320 = vmatprep.subr.mxu0 0.0
        %1321 = vmatpush1.msra.mxu0 0.0
        %1322 = vmatprep.subr.mxu0 0.0
        %1323 = vmatpush1.msra.mxu0 0.0
        %1324 = vmatprep.subr.mxu0 0.0
        %1325 = vmatpush1.msra.mxu0 0.0
        %1326 = vmatprep.subr.mxu0 0.0
        %1327 = vmatpush1.msra.mxu0 0.0
        %1328 = vmatprep.subr.mxu0 0.0
        %1329 = vmatpush1.msra.mxu0 0.0
        %1330 = vmatprep.subr.mxu0 0.0
        %1331 = vmatpush1.msra.mxu0 0.0
        %1332 = vmatprep.subr.mxu0 0.0
        %1333 = vmatpush1.msra.mxu0 0.0
        %1334 = vmatprep.subr.mxu0 0.0
        %1335 = vmatpush1.msra.mxu0 0.0
        %1336 = vmatprep.subr.mxu0 0.0
        %1337 = vmatpush1.msra.mxu0 0.0
        %1338 = vmatprep.subr.mxu0 0.0
        %1339 = vmatpush1.msra.mxu0 0.0
        %1340 = vmatprep.subr.mxu0 0.0
        %1341 = vmatpush1.msra.mxu0 0.0
        %1342 = vmatprep.subr.mxu0 0.0
        %1343 = vmatpush1.msra.mxu0 0.0
        %1344 = vmatprep.subr.mxu0 0.0
        %1345 = vmatpush1.msra.mxu0 0.0
        %1346 = vmatprep.mubr.f32.mxu0 0.0
        %1347 = vmatmul.mubr.f32.gmra.mrb[0].mxu0 %v1271
        %v1348 = vpop.f32.mrb[0].mxu0
        %v1349 = vadd.f32 %v1268, %v1348
        %v1350 = vpop.f32.mrb[0].mxu0
        %1351 = vmatprep.mubr.f32.mxu0 0.0
        %1352 = vmatmul.mubr.f32.gmra.mrb[0].mxu0 %v1274
        %v1353 = vpop.f32.mrb[0].mxu0
        %v1354 = vadd.f32 %v1268, %v1353
        %v1355 = vpop.f32.mrb[0].mxu0
        %1356 = vmatprep.mubr.f32.mxu0 0.0
        %1357 = vmatmul.mubr.f32.gmra.mrb[0].mxu0 %v1277
        %v1358 = vpop.f32.mrb[0].mxu0
        %v1359 = vadd.f32 %v1268, %v1358
        %v1360 = vpop.f32.mrb[0].mxu0
        %1361 = vmatprep.mubr.f32.mxu0 0.0
        %1362 = vmatmul.mubr.f32.gmra.mrb[0].mxu0 %v1280
        %v1363 = vpop.f32.mrb[0].mxu0
        %v1364 = vadd.f32 %v1268, %v1363
        %v1365 = vpop.f32.mrb[0].mxu0
        %1366 = vdwg.mxu0
        %v1367 = vmax.f32 %v1349, 0.0
        %v1368 = vmax.f32 %v1354, 0.0
        %v1369 = vmax.f32 %v1359, 0.0
        %v1370 = vmax.f32 %v1364, 0.0
        %v1371 = vld [vmem:[#allocation16] sm:$0xff]
        %v1372 = vld [vmem:[#allocation16 + $0x8] sm:$0xff]
        %v1373 = vld [vmem:[#allocation16 + $0x10] sm:$0xff]
        %v1374 = vld [vmem:[#allocation16 + $0x18] sm:$0xff]
        %v1375 = vld [vmem:[#allocation16 + $0x20] sm:$0xff]
        %v1376 = vld [vmem:[#allocation16 + $0x28] sm:$0xff]
        %v1377 = vld [vmem:[#allocation16 + $0x30] sm:$0xff]
        %v1378 = vld [vmem:[#allocation16 + $0x38] sm:$0xff]
        %v1380 = vsel %vm662, %v1371, 0
        %v1383 = vsel %vm662, %v1372, 0
        %v1386 = vsel %vm662, %v1373, 0
        %v1389 = vsel %vm662, %v1374, 0
        %v1392 = vsel %vm662, %v1375, 0
        %v1395 = vsel %vm662, %v1376, 0
        %v1398 = vsel %vm662, %v1377, 0
        %v1401 = vsel %vm662, %v1378, 0
        %1403 = vmatprep.subr.mxu0 0.0
        %1404 = vmatpush1.msra.mxu0 %v1367
        %1405 = vmatprep.subr.mxu0 0.0
        %1406 = vmatpush1.msra.mxu0 %v1368
        %1407 = vmatprep.subr.mxu0 0.0
        %1408 = vmatpush1.msra.mxu0 %v1369
        %1409 = vmatprep.subr.mxu0 0.0
        %1410 = vmatpush1.msra.mxu0 %v1370
        %1411 = vmatprep.subr.mxu0 0.0
        %1412 = vmatpush1.msra.mxu0 0.0
        %1413 = vmatprep.subr.mxu0 0.0
        %1414 = vmatpush1.msra.mxu0 0.0
        %1415 = vmatprep.subr.mxu0 0.0
        %1416 = vmatpush1.msra.mxu0 0.0
        %1417 = vmatprep.subr.mxu0 0.0
        %1418 = vmatpush1.msra.mxu0 0.0
        %1419 = vmatprep.subr.mxu0 0.0
        %1420 = vmatpush1.msra.mxu0 0.0
        %1421 = vmatprep.subr.mxu0 0.0
        %1422 = vmatpush1.msra.mxu0 0.0
        %1423 = vmatprep.subr.mxu0 0.0
        %1424 = vmatpush1.msra.mxu0 0.0
        %1425 = vmatprep.subr.mxu0 0.0
        %1426 = vmatpush1.msra.mxu0 0.0
        %1427 = vmatprep.subr.mxu0 0.0
        %1428 = vmatpush1.msra.mxu0 0.0
        %1429 = vmatprep.subr.mxu0 0.0
        %1430 = vmatpush1.msra.mxu0 0.0
        %1431 = vmatprep.subr.mxu0 0.0
        %1432 = vmatpush1.msra.mxu0 0.0
        %1433 = vmatprep.subr.mxu0 0.0
        %1434 = vmatpush1.msra.mxu0 0.0
        %1435 = vmatprep.subr.mxu0 0.0
        %1436 = vmatpush1.msra.mxu0 0.0
        %1437 = vmatprep.subr.mxu0 0.0
        %1438 = vmatpush1.msra.mxu0 0.0
        %1439 = vmatprep.subr.mxu0 0.0
        %1440 = vmatpush1.msra.mxu0 0.0
        %1441 = vmatprep.subr.mxu0 0.0
        %1442 = vmatpush1.msra.mxu0 0.0
        %1443 = vmatprep.subr.mxu0 0.0
        %1444 = vmatpush1.msra.mxu0 0.0
        %1445 = vmatprep.subr.mxu0 0.0
        %1446 = vmatpush1.msra.mxu0 0.0
        %1447 = vmatprep.subr.mxu0 0.0
        %1448 = vmatpush1.msra.mxu0 0.0
        %1449 = vmatprep.subr.mxu0 0.0
        %1450 = vmatpush1.msra.mxu0 0.0
        %1451 = vmatprep.subr.mxu0 0.0
        %1452 = vmatpush1.msra.mxu0 0.0
        %1453 = vmatprep.subr.mxu0 0.0
        %1454 = vmatpush1.msra.mxu0 0.0
        %1455 = vmatprep.subr.mxu0 0.0
        %1456 = vmatpush1.msra.mxu0 0.0
        %1457 = vmatprep.subr.mxu0 0.0
        %1458 = vmatpush1.msra.mxu0 0.0
        %1459 = vmatprep.subr.mxu0 0.0
        %1460 = vmatpush1.msra.mxu0 0.0
        %1461 = vmatprep.subr.mxu0 0.0
        %1462 = vmatpush1.msra.mxu0 0.0
        %1463 = vmatprep.subr.mxu0 0.0
        %1464 = vmatpush1.msra.mxu0 0.0
        %1465 = vmatprep.subr.mxu0 0.0
        %1466 = vmatpush1.msra.mxu0 0.0
        %1467 = vmatprep.mubr.f32.mxu0 0.0
        %1468 = vmatmul.mubr.f32.gmra.mrb[0].mxu0 %v1380
        %v1469 = vpop.f32.mrb[0].mxu0
        %v1470 = vadd.f32 0.0, %v1469
        %v1471 = vpop.f32.mrb[0].mxu0
        %1472 = vmatprep.mubr.f32.mxu0 0.0
        %1473 = vmatmul.mubr.f32.gmra.mrb[0].mxu0 %v1383
        %v1474 = vpop.f32.mrb[0].mxu0
        %v1475 = vadd.f32 0.0, %v1474
        %v1476 = vpop.f32.mrb[0].mxu0
        %1477 = vmatprep.mubr.f32.mxu0 0.0
        %1478 = vmatmul.mubr.f32.gmra.mrb[0].mxu0 %v1386
        %v1479 = vpop.f32.mrb[0].mxu0
        %v1480 = vadd.f32 0.0, %v1479
        %v1481 = vpop.f32.mrb[0].mxu0
        %1482 = vmatprep.mubr.f32.mxu0 0.0
        %1483 = vmatmul.mubr.f32.gmra.mrb[0].mxu0 %v1389
        %v1484 = vpop.f32.mrb[0].mxu0
        %v1485 = vadd.f32 0.0, %v1484
        %v1486 = vpop.f32.mrb[0].mxu0
        %1487 = vmatprep.mubr.f32.mxu0 0.0
        %1488 = vmatmul.mubr.f32.gmra.mrb[0].mxu0 %v1392
        %v1489 = vpop.f32.mrb[0].mxu0
        %v1490 = vadd.f32 0.0, %v1489
        %v1491 = vpop.f32.mrb[0].mxu0
        %1492 = vmatprep.mubr.f32.mxu0 0.0
        %1493 = vmatmul.mubr.f32.gmra.mrb[0].mxu0 %v1395
        %v1494 = vpop.f32.mrb[0].mxu0
        %v1495 = vadd.f32 0.0, %v1494
        %v1496 = vpop.f32.mrb[0].mxu0
        %1497 = vmatprep.mubr.f32.mxu0 0.0
        %1498 = vmatmul.mubr.f32.gmra.mrb[0].mxu0 %v1398
        %v1499 = vpop.f32.mrb[0].mxu0
        %v1500 = vadd.f32 0.0, %v1499
        %v1501 = vpop.f32.mrb[0].mxu0
        %1502 = vmatprep.mubr.f32.mxu0 0.0
        %1503 = vmatmul.mubr.f32.gmra.mrb[0].mxu0 %v1401
        %v1504 = vpop.f32.mrb[0].mxu0
        %v1505 = vadd.f32 0.0, %v1504
        %v1506 = vpop.f32.mrb[0].mxu0
        %1507 = vdwg.mxu0
        %v1508 = vld [vmem:[#allocation18] sm:$0xff]
        %v1509 = vld [vmem:[#allocation18 + $0x8] sm:$0xff]
        %v1510 = vld [vmem:[#allocation18 + $0x10] sm:$0xff]
        %v1511 = vld [vmem:[#allocation18 + $0x18] sm:$0xff]
        %v1512 = vld [vmem:[#allocation18 + $0x20] sm:$0xff]
        %v1513 = vld [vmem:[#allocation18 + $0x28] sm:$0xff]
        %v1514 = vld [vmem:[#allocation18 + $0x30] sm:$0xff]
        %v1515 = vld [vmem:[#allocation18 + $0x38] sm:$0xff]
        %v1516 = vld [vmem:[%s11] sm:$0xff]
        %v1517 = vld [vmem:[%s11 + $0x8] sm:$0xff]
        %v1518 = vld [vmem:[%s11 + $0x10] sm:$0xff]
        %v1519 = vld [vmem:[%s11 + $0x18] sm:$0xff]
        %v1521 = vsel %vm662, %v1470, 0
        %v1524 = vsel %vm662, %v1475, 0
        %v1527 = vsel %vm662, %v1480, 0
        %v1530 = vsel %vm662, %v1485, 0
        %v1533 = vsel %vm662, %v1490, 0
        %v1536 = vsel %vm662, %v1495, 0
        %v1539 = vsel %vm662, %v1500, 0
        %v1542 = vsel %vm662, %v1505, 0
        %1544 = vmatprep.subr.mxu0 0.0
        %1545 = vmatpush1.msra.mxu0 %v1516
        %1546 = vmatprep.subr.mxu0 0.0
        %1547 = vmatpush1.msra.mxu0 %v1517
        %1548 = vmatprep.subr.mxu0 0.0
        %1549 = vmatpush1.msra.mxu0 %v1518
        %1550 = vmatprep.subr.mxu0 0.0
        %1551 = vmatpush1.msra.mxu0 %v1519
        %1552 = vmatprep.subr.mxu0 0.0
        %1553 = vmatpush1.msra.mxu0 0.0
        %1554 = vmatprep.subr.mxu0 0.0
        %1555 = vmatpush1.msra.mxu0 0.0
        %1556 = vmatprep.subr.mxu0 0.0
        %1557 = vmatpush1.msra.mxu0 0.0
        %1558 = vmatprep.subr.mxu0 0.0
        %1559 = vmatpush1.msra.mxu0 0.0
        %1560 = vmatprep.subr.mxu0 0.0
        %1561 = vmatpush1.msra.mxu0 0.0
        %1562 = vmatprep.subr.mxu0 0.0
        %1563 = vmatpush1.msra.mxu0 0.0
        %1564 = vmatprep.subr.mxu0 0.0
        %1565 = vmatpush1.msra.mxu0 0.0
        %1566 = vmatprep.subr.mxu0 0.0
        %1567 = vmatpush1.msra.mxu0 0.0
        %1568 = vmatprep.subr.mxu0 0.0
        %1569 = vmatpush1.msra.mxu0 0.0
        %1570 = vmatprep.subr.mxu0 0.0
        %1571 = vmatpush1.msra.mxu0 0.0
        %1572 = vmatprep.subr.mxu0 0.0
        %1573 = vmatpush1.msra.mxu0 0.0
        %1574 = vmatprep.subr.mxu0 0.0
        %1575 = vmatpush1.msra.mxu0 0.0
        %1576 = vmatprep.subr.mxu0 0.0
        %1577 = vmatpush1.msra.mxu0 0.0
        %1578 = vmatprep.subr.mxu0 0.0
        %1579 = vmatpush1.msra.mxu0 0.0
        %1580 = vmatprep.subr.mxu0 0.0
        %1581 = vmatpush1.msra.mxu0 0.0
        %1582 = vmatprep.subr.mxu0 0.0
        %1583 = vmatpush1.msra.mxu0 0.0
        %1584 = vmatprep.subr.mxu0 0.0
        %1585 = vmatpush1.msra.mxu0 0.0
        %1586 = vmatprep.subr.mxu0 0.0
        %1587 = vmatpush1.msra.mxu0 0.0
        %1588 = vmatprep.subr.mxu0 0.0
        %1589 = vmatpush1.msra.mxu0 0.0
        %1590 = vmatprep.subr.mxu0 0.0
        %1591 = vmatpush1.msra.mxu0 0.0
        %1592 = vmatprep.subr.mxu0 0.0
        %1593 = vmatpush1.msra.mxu0 0.0
        %1594 = vmatprep.subr.mxu0 0.0
        %1595 = vmatpush1.msra.mxu0 0.0
        %1596 = vmatprep.subr.mxu0 0.0
        %1597 = vmatpush1.msra.mxu0 0.0
        %1598 = vmatprep.subr.mxu0 0.0
        %1599 = vmatpush1.msra.mxu0 0.0
        %1600 = vmatprep.subr.mxu0 0.0
        %1601 = vmatpush1.msra.mxu0 0.0
        %1602 = vmatprep.subr.mxu0 0.0
        %1603 = vmatpush1.msra.mxu0 0.0
        %1604 = vmatprep.subr.mxu0 0.0
        %1605 = vmatpush1.msra.mxu0 0.0
        %1606 = vmatprep.subr.mxu0 0.0
        %1607 = vmatpush1.msra.mxu0 0.0
        %1608 = vmatprep.mubr.f32.mxu0 0.0
        %1609 = vmatmul.mubr.f32.gmra.mrb[0].mxu0 %v1521
        %v1610 = vpop.f32.mrb[0].mxu0
        %v1611 = vadd.f32 0.0, %v1610
        %v1612 = vpop.f32.mrb[0].mxu0
        %1613 = vmatprep.mubr.f32.mxu0 0.0
        %1614 = vmatmul.mubr.f32.gmra.mrb[0].mxu0 %v1524
        %v1615 = vpop.f32.mrb[0].mxu0
        %v1616 = vadd.f32 0.0, %v1615
        %v1617 = vpop.f32.mrb[0].mxu0
        %1618 = vmatprep.mubr.f32.mxu0 0.0
        %1619 = vmatmul.mubr.f32.gmra.mrb[0].mxu0 %v1527
        %v1620 = vpop.f32.mrb[0].mxu0
        %v1621 = vadd.f32 0.0, %v1620
        %v1622 = vpop.f32.mrb[0].mxu0
        %1623 = vmatprep.mubr.f32.mxu0 0.0
        %1624 = vmatmul.mubr.f32.gmra.mrb[0].mxu0 %v1530
        %v1625 = vpop.f32.mrb[0].mxu0
        %v1626 = vadd.f32 0.0, %v1625
        %v1627 = vpop.f32.mrb[0].mxu0
        %1628 = vmatprep.mubr.f32.mxu0 0.0
        %1629 = vmatmul.mubr.f32.gmra.mrb[0].mxu0 %v1533
        %v1630 = vpop.f32.mrb[0].mxu0
        %v1631 = vadd.f32 0.0, %v1630
        %v1632 = vpop.f32.mrb[0].mxu0
        %1633 = vmatprep.mubr.f32.mxu0 0.0
        %1634 = vmatmul.mubr.f32.gmra.mrb[0].mxu0 %v1536
        %v1635 = vpop.f32.mrb[0].mxu0
        %v1636 = vadd.f32 0.0, %v1635
        %v1637 = vpop.f32.mrb[0].mxu0
        %1638 = vmatprep.mubr.f32.mxu0 0.0
        %1639 = vmatmul.mubr.f32.gmra.mrb[0].mxu0 %v1539
        %v1640 = vpop.f32.mrb[0].mxu0
        %v1641 = vadd.f32 0.0, %v1640
        %v1642 = vpop.f32.mrb[0].mxu0
        %1643 = vmatprep.mubr.f32.mxu0 0.0
        %1644 = vmatmul.mubr.f32.gmra.mrb[0].mxu0 %v1542
        %v1645 = vpop.f32.mrb[0].mxu0
        %v1646 = vadd.f32 0.0, %v1645
        %v1647 = vpop.f32.mrb[0].mxu0
        %1648 = vdwg.mxu0
        %v1649 = vld [vmem:[#allocation19] sm:$0x1]
        %v1651 = vlaneseq
        %v1652 = vshrl.u32 %v1651, 7
        %v1653 = vsub.s32 0, %v1652
        %v1654 = vrot.slane %v1649, %v1653
        %vm1656 = vcmask 523264
        %v1658 = vsel %vm1656, %v1508, 0
        %v1661 = vsel %vm1656, %v1509, 0
        %v1664 = vsel %vm1656, %v1510, 0
        %v1667 = vsel %vm1656, %v1511, 0
        %v1670 = vsel %vm1656, %v1512, 0
        %v1673 = vsel %vm1656, %v1513, 0
        %v1676 = vsel %vm1656, %v1514, 0
        %v1679 = vsel %vm1656, %v1515, 0
        %1681 = vmatprep.subr.mxu0 0.0
        %1682 = vmatpush1.msra.mxu0 %v1611
        %1683 = vmatprep.subr.mxu0 0.0
        %1684 = vmatpush1.msra.mxu0 %v1616
        %1685 = vmatprep.subr.mxu0 0.0
        %1686 = vmatpush1.msra.mxu0 %v1621
        %1687 = vmatprep.subr.mxu0 0.0
        %1688 = vmatpush1.msra.mxu0 %v1626
        %1689 = vmatprep.subr.mxu0 0.0
        %1690 = vmatpush1.msra.mxu0 %v1631
        %1691 = vmatprep.subr.mxu0 0.0
        %1692 = vmatpush1.msra.mxu0 %v1636
        %1693 = vmatprep.subr.mxu0 0.0
        %1694 = vmatpush1.msra.mxu0 %v1641
        %1695 = vmatprep.subr.mxu0 0.0
        %1696 = vmatpush1.msra.mxu0 %v1646
        %1697 = vmatprep.subr.mxu0 0.0
        %1698 = vmatpush1.msra.mxu0 0.0
        %1699 = vmatprep.subr.mxu0 0.0
        %1700 = vmatpush1.msra.mxu0 0.0
        %1701 = vmatprep.subr.mxu0 0.0
        %1702 = vmatpush1.msra.mxu0 0.0
        %1703 = vmatprep.subr.mxu0 0.0
        %1704 = vmatpush1.msra.mxu0 0.0
        %1705 = vmatprep.subr.mxu0 0.0
        %1706 = vmatpush1.msra.mxu0 0.0
        %1707 = vmatprep.subr.mxu0 0.0
        %1708 = vmatpush1.msra.mxu0 0.0
        %1709 = vmatprep.subr.mxu0 0.0
        %1710 = vmatpush1.msra.mxu0 0.0
        %1711 = vmatprep.subr.mxu0 0.0
        %1712 = vmatpush1.msra.mxu0 0.0
        %1713 = vmatprep.subr.mxu0 0.0
        %1714 = vmatpush1.msra.mxu0 0.0
        %1715 = vmatprep.subr.mxu0 0.0
        %1716 = vmatpush1.msra.mxu0 0.0
        %1717 = vmatprep.subr.mxu0 0.0
        %1718 = vmatpush1.msra.mxu0 0.0
        %1719 = vmatprep.subr.mxu0 0.0
        %1720 = vmatpush1.msra.mxu0 0.0
        %1721 = vmatprep.subr.mxu0 0.0
        %1722 = vmatpush1.msra.mxu0 0.0
        %1723 = vmatprep.subr.mxu0 0.0
        %1724 = vmatpush1.msra.mxu0 0.0
        %1725 = vmatprep.subr.mxu0 0.0
        %1726 = vmatpush1.msra.mxu0 0.0
        %1727 = vmatprep.subr.mxu0 0.0
        %1728 = vmatpush1.msra.mxu0 0.0
        %1729 = vmatprep.subr.mxu0 0.0
        %1730 = vmatpush1.msra.mxu0 0.0
        %1731 = vmatprep.subr.mxu0 0.0
        %1732 = vmatpush1.msra.mxu0 0.0
        %1733 = vmatprep.subr.mxu0 0.0
        %1734 = vmatpush1.msra.mxu0 0.0
        %1735 = vmatprep.subr.mxu0 0.0
        %1736 = vmatpush1.msra.mxu0 0.0
        %1737 = vmatprep.subr.mxu0 0.0
        %1738 = vmatpush1.msra.mxu0 0.0
        %1739 = vmatprep.subr.mxu0 0.0
        %1740 = vmatpush1.msra.mxu0 0.0
        %1741 = vmatprep.subr.mxu0 0.0
        %1742 = vmatpush1.msra.mxu0 0.0
        %1743 = vmatprep.subr.mxu0 0.0
        %1744 = vmatpush1.msra.mxu0 0.0
        %1745 = vmatprep.mubr.f32.mxu0 0.0
        %1746 = vmatmul.mubr.f32.gmra.mrb[0].mxu0 %v1658
        %v1747 = vpop.f32.mrb[0].mxu0
        %v1748 = vadd.f32 %v1654, %v1747
        %v1749 = vpop.f32.mrb[0].mxu0
        %1750 = vmatprep.mubr.f32.mxu0 0.0
        %1751 = vmatmul.mubr.f32.gmra.mrb[0].mxu0 %v1661
        %v1752 = vpop.f32.mrb[0].mxu0
        %v1753 = vadd.f32 %v1654, %v1752
        %v1754 = vpop.f32.mrb[0].mxu0
        %1755 = vmatprep.mubr.f32.mxu0 0.0
        %1756 = vmatmul.mubr.f32.gmra.mrb[0].mxu0 %v1664
        %v1757 = vpop.f32.mrb[0].mxu0
        %v1758 = vadd.f32 %v1654, %v1757
        %v1759 = vpop.f32.mrb[0].mxu0
        %1760 = vmatprep.mubr.f32.mxu0 0.0
        %1761 = vmatmul.mubr.f32.gmra.mrb[0].mxu0 %v1667
        %v1762 = vpop.f32.mrb[0].mxu0
        %v1763 = vadd.f32 %v1654, %v1762
        %v1764 = vpop.f32.mrb[0].mxu0
        %1765 = vmatprep.mubr.f32.mxu0 0.0
        %1766 = vmatmul.mubr.f32.gmra.mrb[0].mxu0 %v1670
        %v1767 = vpop.f32.mrb[0].mxu0
        %v1768 = vadd.f32 %v1654, %v1767
        %v1769 = vpop.f32.mrb[0].mxu0
        %1770 = vmatprep.mubr.f32.mxu0 0.0
        %1771 = vmatmul.mubr.f32.gmra.mrb[0].mxu0 %v1673
        %v1772 = vpop.f32.mrb[0].mxu0
        %v1773 = vadd.f32 %v1654, %v1772
        %v1774 = vpop.f32.mrb[0].mxu0
        %1775 = vmatprep.mubr.f32.mxu0 0.0
        %1776 = vmatmul.mubr.f32.gmra.mrb[0].mxu0 %v1676
        %v1777 = vpop.f32.mrb[0].mxu0
        %v1778 = vadd.f32 %v1654, %v1777
        %v1779 = vpop.f32.mrb[0].mxu0
        %1780 = vmatprep.mubr.f32.mxu0 0.0
        %1781 = vmatmul.mubr.f32.gmra.mrb[0].mxu0 %v1679
        %v1782 = vpop.f32.mrb[0].mxu0
        %v1783 = vadd.f32 %v1654, %v1782
        %v1784 = vpop.f32.mrb[0].mxu0
        %1785 = vdwg.mxu0
        %v1786 = vmax.f32 %v1748, 0.0
        %v1787 = vmax.f32 %v1753, 0.0
        %v1788 = vmax.f32 %v1758, 0.0
        %v1789 = vmax.f32 %v1763, 0.0
        %v1790 = vmax.f32 %v1768, 0.0
        %v1791 = vmax.f32 %v1773, 0.0
        %v1792 = vmax.f32 %v1778, 0.0
        %v1793 = vmax.f32 %v1783, 0.0
        %v1794 = vld [vmem:[%s13] sm:$0xff]
        %v1795 = vld [vmem:[%s13 + $0x8] sm:$0xff]
        %v1797 = vsel %vm1060, %v1786, 0
        %v1800 = vsel %vm1060, %v1787, 0
        %v1803 = vsel %vm1060, %v1788, 0
        %v1806 = vsel %vm1060, %v1789, 0
        %v1809 = vsel %vm1060, %v1790, 0
        %v1812 = vsel %vm1060, %v1791, 0
        %v1815 = vsel %vm1060, %v1792, 0
        %v1818 = vsel %vm1060, %v1793, 0
        %1820 = vmatprep.subr.mxu0 0.0
        %1821 = vmatpush1.msra.mxu0 %v1794
        %1822 = vmatprep.subr.mxu0 0.0
        %1823 = vmatpush1.msra.mxu0 %v1795
        %1824 = vmatprep.subr.mxu0 0.0
        %1825 = vmatpush1.msra.mxu0 0.0
        %1826 = vmatprep.subr.mxu0 0.0
        %1827 = vmatpush1.msra.mxu0 0.0
        %1828 = vmatprep.subr.mxu0 0.0
        %1829 = vmatpush1.msra.mxu0 0.0
        %1830 = vmatprep.subr.mxu0 0.0
        %1831 = vmatpush1.msra.mxu0 0.0
        %1832 = vmatprep.subr.mxu0 0.0
        %1833 = vmatpush1.msra.mxu0 0.0
        %1834 = vmatprep.subr.mxu0 0.0
        %1835 = vmatpush1.msra.mxu0 0.0
        %1836 = vmatprep.subr.mxu0 0.0
        %1837 = vmatpush1.msra.mxu0 0.0
        %1838 = vmatprep.subr.mxu0 0.0
        %1839 = vmatpush1.msra.mxu0 0.0
        %1840 = vmatprep.subr.mxu0 0.0
        %1841 = vmatpush1.msra.mxu0 0.0
        %1842 = vmatprep.subr.mxu0 0.0
        %1843 = vmatpush1.msra.mxu0 0.0
        %1844 = vmatprep.subr.mxu0 0.0
        %1845 = vmatpush1.msra.mxu0 0.0
        %1846 = vmatprep.subr.mxu0 0.0
        %1847 = vmatpush1.msra.mxu0 0.0
        %1848 = vmatprep.subr.mxu0 0.0
        %1849 = vmatpush1.msra.mxu0 0.0
        %1850 = vmatprep.subr.mxu0 0.0
        %1851 = vmatpush1.msra.mxu0 0.0
        %1852 = vmatprep.subr.mxu0 0.0
        %1853 = vmatpush1.msra.mxu0 0.0
        %1854 = vmatprep.subr.mxu0 0.0
        %1855 = vmatpush1.msra.mxu0 0.0
        %1856 = vmatprep.subr.mxu0 0.0
        %1857 = vmatpush1.msra.mxu0 0.0
        %1858 = vmatprep.subr.mxu0 0.0
        %1859 = vmatpush1.msra.mxu0 0.0
        %1860 = vmatprep.subr.mxu0 0.0
        %1861 = vmatpush1.msra.mxu0 0.0
        %1862 = vmatprep.subr.mxu0 0.0
        %1863 = vmatpush1.msra.mxu0 0.0
        %1864 = vmatprep.subr.mxu0 0.0
        %1865 = vmatpush1.msra.mxu0 0.0
        %1866 = vmatprep.subr.mxu0 0.0
        %1867 = vmatpush1.msra.mxu0 0.0
        %1868 = vmatprep.subr.mxu0 0.0
        %1869 = vmatpush1.msra.mxu0 0.0
        %1870 = vmatprep.subr.mxu0 0.0
        %1871 = vmatpush1.msra.mxu0 0.0
        %1872 = vmatprep.subr.mxu0 0.0
        %1873 = vmatpush1.msra.mxu0 0.0
        %1874 = vmatprep.subr.mxu0 0.0
        %1875 = vmatpush1.msra.mxu0 0.0
        %1876 = vmatprep.subr.mxu0 0.0
        %1877 = vmatpush1.msra.mxu0 0.0
        %1878 = vmatprep.subr.mxu0 0.0
        %1879 = vmatpush1.msra.mxu0 0.0
        %1880 = vmatprep.subr.mxu0 0.0
        %1881 = vmatpush1.msra.mxu0 0.0
        %1882 = vmatprep.subr.mxu0 0.0
        %1883 = vmatpush1.msra.mxu0 0.0
        %1884 = vmatprep.mubr.f32.mxu0 0.0
        %1885 = vmatmul.mubr.f32.gmra.mrb[0].mxu0 %v1797
        %v1886 = vpop.f32.mrb[0].mxu0
        %v1887 = vadd.f32 0.0, %v1886
        %v1888 = vpop.f32.mrb[0].mxu0
        %1889 = vmatprep.mubr.f32.mxu0 0.0
        %1890 = vmatmul.mubr.f32.gmra.mrb[0].mxu0 %v1800
        %v1891 = vpop.f32.mrb[0].mxu0
        %v1892 = vadd.f32 0.0, %v1891
        %v1893 = vpop.f32.mrb[0].mxu0
        %1894 = vmatprep.mubr.f32.mxu0 0.0
        %1895 = vmatmul.mubr.f32.gmra.mrb[0].mxu0 %v1803
        %v1896 = vpop.f32.mrb[0].mxu0
        %v1897 = vadd.f32 0.0, %v1896
        %v1898 = vpop.f32.mrb[0].mxu0
        %1899 = vmatprep.mubr.f32.mxu0 0.0
        %1900 = vmatmul.mubr.f32.gmra.mrb[0].mxu0 %v1806
        %v1901 = vpop.f32.mrb[0].mxu0
        %v1902 = vadd.f32 0.0, %v1901
        %v1903 = vpop.f32.mrb[0].mxu0
        %1904 = vmatprep.mubr.f32.mxu0 0.0
        %1905 = vmatmul.mubr.f32.gmra.mrb[0].mxu0 %v1809
        %v1906 = vpop.f32.mrb[0].mxu0
        %v1907 = vadd.f32 0.0, %v1906
        %v1908 = vpop.f32.mrb[0].mxu0
        %1909 = vmatprep.mubr.f32.mxu0 0.0
        %1910 = vmatmul.mubr.f32.gmra.mrb[0].mxu0 %v1812
        %v1911 = vpop.f32.mrb[0].mxu0
        %v1912 = vadd.f32 0.0, %v1911
        %v1913 = vpop.f32.mrb[0].mxu0
        %1914 = vmatprep.mubr.f32.mxu0 0.0
        %1915 = vmatmul.mubr.f32.gmra.mrb[0].mxu0 %v1815
        %v1916 = vpop.f32.mrb[0].mxu0
        %v1917 = vadd.f32 0.0, %v1916
        %v1918 = vpop.f32.mrb[0].mxu0
        %1919 = vmatprep.mubr.f32.mxu0 0.0
        %1920 = vmatmul.mubr.f32.gmra.mrb[0].mxu0 %v1818
        %v1921 = vpop.f32.mrb[0].mxu0
        %v1922 = vadd.f32 0.0, %v1921
        %v1923 = vpop.f32.mrb[0].mxu0
        %1924 = vdwg.mxu0
        %v1925 = vld [vmem:[%s14] sm:$0x1]
        %v1927 = vlaneseq
        %v1928 = vshrl.u32 %v1927, 7
        %v1929 = vsub.s32 0, %v1928
        %v1930 = vrot.slane %v1925, %v1929
        %1932 = vmatprep.subr.mxu0 0.0
        %1933 = vmatpush1.msra.mxu0 %v1887
        %1934 = vmatprep.subr.mxu0 0.0
        %1935 = vmatpush1.msra.mxu0 %v1892
        %1936 = vmatprep.subr.mxu0 0.0
        %1937 = vmatpush1.msra.mxu0 %v1897
        %1938 = vmatprep.subr.mxu0 0.0
        %1939 = vmatpush1.msra.mxu0 %v1902
        %1940 = vmatprep.subr.mxu0 0.0
        %1941 = vmatpush1.msra.mxu0 %v1907
        %1942 = vmatprep.subr.mxu0 0.0
        %1943 = vmatpush1.msra.mxu0 %v1912
        %1944 = vmatprep.subr.mxu0 0.0
        %1945 = vmatpush1.msra.mxu0 %v1917
        %1946 = vmatprep.subr.mxu0 0.0
        %1947 = vmatpush1.msra.mxu0 %v1922
        %1948 = vmatprep.subr.mxu0 0.0
        %1949 = vmatpush1.msra.mxu0 0.0
        %1950 = vmatprep.subr.mxu0 0.0
        %1951 = vmatpush1.msra.mxu0 0.0
        %1952 = vmatprep.subr.mxu0 0.0
        %1953 = vmatpush1.msra.mxu0 0.0
        %1954 = vmatprep.subr.mxu0 0.0
        %1955 = vmatpush1.msra.mxu0 0.0
        %1956 = vmatprep.subr.mxu0 0.0
        %1957 = vmatpush1.msra.mxu0 0.0
        %1958 = vmatprep.subr.mxu0 0.0
        %1959 = vmatpush1.msra.mxu0 0.0
        %1960 = vmatprep.subr.mxu0 0.0
        %1961 = vmatpush1.msra.mxu0 0.0
        %1962 = vmatprep.subr.mxu0 0.0
        %1963 = vmatpush1.msra.mxu0 0.0
        %1964 = vmatprep.subr.mxu0 0.0
        %1965 = vmatpush1.msra.mxu0 0.0
        %1966 = vmatprep.subr.mxu0 0.0
        %1967 = vmatpush1.msra.mxu0 0.0
        %1968 = vmatprep.subr.mxu0 0.0
        %1969 = vmatpush1.msra.mxu0 0.0
        %1970 = vmatprep.subr.mxu0 0.0
        %1971 = vmatpush1.msra.mxu0 0.0
        %1972 = vmatprep.subr.mxu0 0.0
        %1973 = vmatpush1.msra.mxu0 0.0
        %1974 = vmatprep.subr.mxu0 0.0
        %1975 = vmatpush1.msra.mxu0 0.0
        %1976 = vmatprep.subr.mxu0 0.0
        %1977 = vmatpush1.msra.mxu0 0.0
        %1978 = vmatprep.subr.mxu0 0.0
        %1979 = vmatpush1.msra.mxu0 0.0
        %1980 = vmatprep.subr.mxu0 0.0
        %1981 = vmatpush1.msra.mxu0 0.0
        %1982 = vmatprep.subr.mxu0 0.0
        %1983 = vmatpush1.msra.mxu0 0.0
        %1984 = vmatprep.subr.mxu0 0.0
        %1985 = vmatpush1.msra.mxu0 0.0
        %1986 = vmatprep.subr.mxu0 0.0
        %1987 = vmatpush1.msra.mxu0 0.0
        %1988 = vmatprep.subr.mxu0 0.0
        %1989 = vmatpush1.msra.mxu0 0.0
        %1990 = vmatprep.subr.mxu0 0.0
        %1991 = vmatpush1.msra.mxu0 0.0
        %1992 = vmatprep.subr.mxu0 0.0
        %1993 = vmatpush1.msra.mxu0 0.0
        %1994 = vmatprep.subr.mxu0 0.0
        %1995 = vmatpush1.msra.mxu0 0.0
        %1996 = vmatprep.mubr.f32.mxu0 0.0
        %1997 = vmatmul.mubr.f32.gmra.mrb[0].mxu0 %v1658
        %v1998 = vpop.f32.mrb[0].mxu0
        %v1999 = vadd.f32 %v1930, %v1998
        %v2000 = vpop.f32.mrb[0].mxu0
        %2001 = vmatprep.mubr.f32.mxu0 0.0
        %2002 = vmatmul.mubr.f32.gmra.mrb[0].mxu0 %v1661
        %v2003 = vpop.f32.mrb[0].mxu0
        %v2004 = vadd.f32 %v1930, %v2003
        %v2005 = vpop.f32.mrb[0].mxu0
        %2006 = vmatprep.mubr.f32.mxu0 0.0
        %2007 = vmatmul.mubr.f32.gmra.mrb[0].mxu0 %v1664
        %v2008 = vpop.f32.mrb[0].mxu0
        %v2009 = vadd.f32 %v1930, %v2008
        %v2010 = vpop.f32.mrb[0].mxu0
        %2011 = vmatprep.mubr.f32.mxu0 0.0
        %2012 = vmatmul.mubr.f32.gmra.mrb[0].mxu0 %v1667
        %v2013 = vpop.f32.mrb[0].mxu0
        %v2014 = vadd.f32 %v1930, %v2013
        %v2015 = vpop.f32.mrb[0].mxu0
        %2016 = vmatprep.mubr.f32.mxu0 0.0
        %2017 = vmatmul.mubr.f32.gmra.mrb[0].mxu0 %v1670
        %v2018 = vpop.f32.mrb[0].mxu0
        %v2019 = vadd.f32 %v1930, %v2018
        %v2020 = vpop.f32.mrb[0].mxu0
        %2021 = vmatprep.mubr.f32.mxu0 0.0
        %2022 = vmatmul.mubr.f32.gmra.mrb[0].mxu0 %v1673
        %v2023 = vpop.f32.mrb[0].mxu0
        %v2024 = vadd.f32 %v1930, %v2023
        %v2025 = vpop.f32.mrb[0].mxu0
        %2026 = vmatprep.mubr.f32.mxu0 0.0
        %2027 = vmatmul.mubr.f32.gmra.mrb[0].mxu0 %v1676
        %v2028 = vpop.f32.mrb[0].mxu0
        %v2029 = vadd.f32 %v1930, %v2028
        %v2030 = vpop.f32.mrb[0].mxu0
        %2031 = vmatprep.mubr.f32.mxu0 0.0
        %2032 = vmatmul.mubr.f32.gmra.mrb[0].mxu0 %v1679
        %v2033 = vpop.f32.mrb[0].mxu0
        %v2034 = vadd.f32 %v1930, %v2033
        %v2035 = vpop.f32.mrb[0].mxu0
        %2036 = vdwg.mxu0
        %vm2037 = vcmask 23552
        %2038 = vst.msk [vmem:[%s643] sm:$0xff] %vm2037, %v1999
        %2039 = vst.msk [vmem:[%s643 + $0x8] sm:$0xff] %vm2037, %v2004
        %2040 = vst.msk [vmem:[%s643 + $0x10] sm:$0xff] %vm2037, %v2009
        %2041 = vst.msk [vmem:[%s643 + $0x18] sm:$0xff] %vm2037, %v2014
        %2042 = vst.msk [vmem:[%s643 + $0x20] sm:$0xff] %vm2037, %v2019
        %2043 = vst.msk [vmem:[%s643 + $0x28] sm:$0xff] %vm2037, %v2024
        %2044 = vst.msk [vmem:[%s643 + $0x30] sm:$0xff] %vm2037, %v2029
        %2045 = vst.msk [vmem:[%s643 + $0x38] sm:$0xff] %vm2037, %v2034
        %p2046 = scmp.lt.s32.totalorder %s33, 1
        %s2047 = scalar_select %p2046, %s33, 1
        %s2048 = smul.addr %s2047, 8
        %s2049 = smul.addr %s2048, 8
        %s2050 = scalar_lea.vmem %s15, %s2049
        // Predicated region
        $region129: #{_lambda_.1} parent=79 // pred_check
          %p2051 = pneg %p366
        $region130: #{_lambda_.1} parent=79 // pred_check_branch
          %2053 = sbr.rel (%p2051) target = $region132
        $region131: #{_lambda_.1} parent=79 // pred_region
          _
        $region132: #{_lambda_.1} parent=79 // pred_fallthru
          _
      $region80: #{_lambda_.1} parent=5 // pred_fallthru
        _
      %p2054 = scmp.le.s32.totalorder 2, %s28
      // Predicated region
      $region133: #{_lambda_.1} parent=5 // pred_check
        %p2055 = pneg %p2054
      $region134: #{_lambda_.1} parent=5 // pred_check_branch
        %2057 = sbr.rel (%p2055) target = $region136
      $region135: #{_lambda_.1} parent=5 // pred_region
        %s2058 = ssub.s32 %s28, 2
        // Predicated region
        $region137: #{_lambda_.1} parent=135 // pred_check
          %p2059 = pneg %p372
        $region138: #{_lambda_.1} parent=135 // pred_check_branch
          %2061 = sbr.rel (%p2059) target = $region140
        $region139: #{_lambda_.1} parent=135 // pred_region
          %p2062 = scmp.lt.s32.totalorder %s34, 1
          %s2063 = scalar_select %p2062, %s34, 1
          %s2064 = smul.addr %s2063, 8
          %s2065 = smul.addr %s2064, 8
          %s2066 = scalar_lea.vmem %s15, %s2065
        $region140: #{_lambda_.1} parent=135 // pred_fallthru
          _
      $region136: #{_lambda_.1} parent=5 // pred_fallthru
        _
    $region6: #{_lambda_.1} parent=1 // loop_footer
      %s32 = sadd.s32 1, %s28
    $region7: #{_lambda_.1} parent=1 // loop_footer_branch
      %27 = sbr.rel target = $region3
    $region8: #{_lambda_.1} parent=1 // loop_exit
      _
    %2067 = vsyncpa [#allocation3], 1
    %s2068 = scalar_lea.sflag [#allocation3], 1
    %2069 = vsyncpa %s2068, 1
    %2070 = vsyncpa [#allocation5], 1
    %2071 = vsyncpa [#allocation8], 1
    %2072 = vsyncpa [#allocation11], 1
    %2073 = vsyncpa [#allocation14], 1
    %2074 = vsyncpa [#allocation17], 1
    %2075 = vsyncpa [#allocation20], 1

</llo_original>
